<compile_context>
chip_gen: v6e
topology: v6e:2x2x1
jax: 0.10.0
libtpu: 0.0.40
codegen_flags: <defaults>
</compile_context>

<pallas_src>
import jax
import jax.numpy as jnp
import numpy as np
from jax.experimental import pallas as pl
from jax.experimental.pallas import tpu as pltpu

LATENT = 20
H1 = 100
H2 = 500
OUT = 28 * 28
EPS = 1e-5

# Padded (lane-dense / MXU-friendly) sizes.
H1P = 128          # 100 -> 128
H2P = 512          # 500 -> 512
OUTP = 896         # 784 -> 896 = 7 * 128


def decoder_kernel(x_ref, w1_ref, b1_ref, w2_ref, b2_ref, w3_ref, b3_ref, o_ref):
    # ---- Linear(20 -> 128) [BN folded] + ReLU   (Dropout = identity, eval)
    x = x_ref[...].astype(jnp.bfloat16)
    h = jnp.dot(x, w1_ref[...], preferred_element_type=jnp.float32) + b1_ref[...]
    h = jnp.maximum(h, 0.0)

    # ---- Linear(128 -> 512) [BN folded] + ReLU
    h = jnp.dot(h.astype(jnp.bfloat16), w2_ref[...],
                preferred_element_type=jnp.float32) + b2_ref[...]
    h = jnp.maximum(h, 0.0)

    # ---- Linear(512 -> 896)
    o = jnp.dot(h.astype(jnp.bfloat16), w3_ref[...],
                preferred_element_type=jnp.float32) + b3_ref[...]
    o_ref[...] = o.astype(o_ref.dtype)


def _fold_and_pack(params):
    """Fold eval-mode BN into the linears, pad to lane-dense sizes, cast weights
    to bf16. Returns the 6 packed arrays the kernel consumes."""
    def fold(w, b, g, bt, m, v):
        s = g / jnp.sqrt(v + EPS)                 # (F_out,)
        return w * s[None, :], (b - m) * s + bt   # w is (F_in, F_out)

    w1, b1 = fold(params["w1"], params["b1"], params["g1"], params["bt1"],
                  params["m1"], params["v1"])
    w2, b2 = fold(params["w2"], params["b2"], params["g2"], params["bt2"],
                  params["m2"], params["v2"])
    w3, b3 = params["w3"], params["b3"]

    def pad2(a, r, c):
        return jnp.pad(a, ((0, r - a.shape[0]), (0, c - a.shape[1])))

    w1p = pad2(w1, LATENT, H1P).astype(jnp.bfloat16)
    w2p = pad2(w2, H1P, H2P).astype(jnp.bfloat16)
    w3p = pad2(w3, H2P, OUTP).astype(jnp.bfloat16)
    b1p = jnp.pad(b1, (0, H1P - H1)).reshape(1, H1P).astype(jnp.float32)
    b2p = jnp.pad(b2, (0, H2P - H2)).reshape(1, H2P).astype(jnp.float32)
    b3p = jnp.pad(b3, (0, OUTP - OUT)).reshape(1, OUTP).astype(jnp.float32)
    return w1p, b1p, w2p, b2p, w3p, b3p


def decoder_forward(x, params, *, tile_b=512):
    """x: (B, LATENT) float32. params: dict of PyTorch-shaped parameters
    (linear weights already transposed to (F_in, F_out))."""
    B = x.shape[0]
    w1p, b1p, w2p, b2p, w3p, b3p = _fold_and_pack(params)

    # Batch tiling: tile must be a multiple of 8 (sublanes); pad B up to it.
    TILE_B = min(tile_b, max(8, ((B + 7) // 8) * 8))
    B_pad = ((B + TILE_B - 1) // TILE_B) * TILE_B
    if B_pad != B:
        x = jnp.pad(x, ((0, B_pad - B), (0, 0)))

    const = lambda i: (0, 0)  # weights stay VMEM-resident across the grid
    out = pl.pallas_call(
        decoder_kernel,
        out_shape=jax.ShapeDtypeStruct((B_pad, OUTP), jnp.float32),
        grid_spec=pltpu.PrefetchScalarGridSpec(
            num_scalar_prefetch=0,
            grid=(B_pad // TILE_B,),
            in_specs=[
                pl.BlockSpec((TILE_B, LATENT), lambda i: (i, 0)),
                pl.BlockSpec((LATENT, H1P), const),
                pl.BlockSpec((1, H1P), const),
                pl.BlockSpec((H1P, H2P), const),
                pl.BlockSpec((1, H2P), const),
                pl.BlockSpec((H2P, OUTP), const),
                pl.BlockSpec((1, OUTP), const),
            ],
            out_specs=pl.BlockSpec((TILE_B, OUTP), lambda i: (i, 0)),
        ),
        compiler_params=pltpu.CompilerParams(
            dimension_semantics=("parallel",),   # shards batch tiles across v7x's 2 TCs
        ),
    )(x, w1p, b1p, w2p, b2p, w3p, b3p)

    return out[:B, :OUT]


def init_params(key):
    """Deterministic init matching the PyTorch module's parameter shapes.
    Linear weights are generated (out,in) then transposed to (in,out)."""
    ks = jax.random.split(key, 6)

    def linear(kw, kb, fan_in, fan_out):
        bound = 1.0 / np.sqrt(fan_in)
        w = jax.random.uniform(kw, (fan_out, fan_in), jnp.float32, -bound, bound)
        b = jax.random.uniform(kb, (fan_out,), jnp.float32, -bound, bound)
        return w.T, b

    w1, b1 = linear(ks[0], ks[1], LATENT, H1)
    w2, b2 = linear(ks[2], ks[3], H1, H2)
    w3, b3 = linear(ks[4], ks[5], H2, OUT)

    def bn(f):
        return (jnp.ones((f,), jnp.float32),    # gamma
                jnp.zeros((f,), jnp.float32),   # beta
                jnp.zeros((f,), jnp.float32),   # running_mean
                jnp.ones((f,), jnp.float32))    # running_var

    g1, bt1, m1, v1 = bn(H1)
    g2, bt2, m2, v2 = bn(H2)

    return dict(w1=w1, b1=b1, g1=g1, bt1=bt1, m1=m1, v1=v1,
                w2=w2, b2=b2, g2=g2, bt2=bt2, m2=m2, v2=v2,
                w3=w3, b3=b3)


def decoder_reference(x, p):
    """Pure-JAX f32 reference of the same eval-mode forward pass (unfolded BN)."""
    h = x @ p["w1"] + p["b1"]
    h = (h - p["m1"]) / jnp.sqrt(p["v1"] + EPS) * p["g1"] + p["bt1"]
    h = jnp.maximum(h, 0.0)
    h = h @ p["w2"] + p["b2"]
    h = (h - p["m2"]) / jnp.sqrt(p["v2"] + EPS) * p["g2"] + p["bt2"]
    h = jnp.maximum(h, 0.0)
    return h @ p["w3"] + p["b3"]


if __name__ == "__main__":
    key = jax.random.PRNGKey(0)
    k_params, k_x = jax.random.split(key)

    params = init_params(k_params)
    B = 8
    x = jax.random.normal(k_x, (B, LATENT), jnp.float32)

    out = decoder_forward(x, params)
    out = jax.block_until_ready(out)

    ref = decoder_reference(x, params)
    assert out.shape == (B, OUT), out.shape
    # bf16 weights / bf16 MXU inputs vs f32 reference -> bf16-level tolerance.
    assert np.allclose(np.asarray(out), np.asarray(ref), atol=5e-2, rtol=5e-2), (
        float(np.max(np.abs(np.asarray(out) - np.asarray(ref)))))

    print("KERNEL_OK")
</pallas_src>

<mosaic_0001>
module attributes {stable_mosaic.version = 11 : i64} {
  func.func @decoder_kernel(%arg0: i32, %arg1: memref<8x20xf32, #tpu.memory_space<vmem>>, %arg2: memref<20x128xbf16, #tpu.memory_space<vmem>>, %arg3: memref<1x128xf32, #tpu.memory_space<vmem>>, %arg4: memref<128x512xbf16, #tpu.memory_space<vmem>>, %arg5: memref<1x512xf32, #tpu.memory_space<vmem>>, %arg6: memref<512x896xbf16, #tpu.memory_space<vmem>>, %arg7: memref<1x896xf32, #tpu.memory_space<vmem>>, %arg8: memref<8x896xf32, #tpu.memory_space<vmem>>) attributes {dimension_semantics = [#tpu.dimension_semantics<parallel>], iteration_bounds = array<i64: 1>, scalar_prefetch = 0 : i64, scratch_operands = 0 : i64, tpu.core_type = #tpu.core_type<tc>, window_params = [{transform_indices = @transform_0, window_bounds = array<i64: 8, 20>}, {pipeline_mode = #tpu.pipeline_mode<synchronous>, transform_indices = @transform_1, window_bounds = array<i64: 20, 128>}, {pipeline_mode = #tpu.pipeline_mode<synchronous>, transform_indices = @transform_2, window_bounds = array<i64: 1, 128>}, {pipeline_mode = #tpu.pipeline_mode<synchronous>, transform_indices = @transform_3, window_bounds = array<i64: 128, 512>}, {pipeline_mode = #tpu.pipeline_mode<synchronous>, transform_indices = @transform_4, window_bounds = array<i64: 1, 512>}, {pipeline_mode = #tpu.pipeline_mode<synchronous>, transform_indices = @transform_5, window_bounds = array<i64: 512, 896>}, {pipeline_mode = #tpu.pipeline_mode<synchronous>, transform_indices = @transform_6, window_bounds = array<i64: 1, 896>}, {transform_indices = @transform_7, window_bounds = array<i64: 8, 896>}]} {
    %c0 = arith.constant 0 : index
    %c0_0 = arith.constant 0 : index
    %0 = vector.load %arg1[%c0, %c0_0] : memref<8x20xf32, #tpu.memory_space<vmem>>, vector<8x20xf32>
    %1 = arith.truncf %0 : vector<8x20xf32> to vector<8x20xbf16>
    %c0_1 = arith.constant 0 : index
    %c0_2 = arith.constant 0 : index
    %2 = vector.load %arg2[%c0_1, %c0_2] : memref<20x128xbf16, #tpu.memory_space<vmem>>, vector<20x128xbf16>
    %cst = arith.constant dense<0.000000e+00> : vector<8x128xf32>
    %3 = tpu.matmul %1, %2, %cst {dimension_numbers = #tpu.dot_dimension_numbers<[1], [0], [0], [1], [0, 0, 1, 1], [], []>} : vector<8x20xbf16>, vector<20x128xbf16>, vector<8x128xf32> -> vector<8x128xf32>
    %c0_3 = arith.constant 0 : index
    %c0_4 = arith.constant 0 : index
    %4 = vector.load %arg3[%c0_3, %c0_4] : memref<1x128xf32, #tpu.memory_space<vmem>>, vector<1x128xf32>
    %5 = vector.broadcast %4 : vector<1x128xf32> to vector<8x128xf32>
    %6 = arith.addf %3, %5 : vector<8x128xf32>
    %cst_5 = arith.constant 0.000000e+00 : f32
    %7 = vector.broadcast %cst_5 : f32 to vector<8x128xf32>
    %8 = arith.maximumf %6, %7 : vector<8x128xf32>
    %9 = arith.truncf %8 : vector<8x128xf32> to vector<8x128xbf16>
    %c0_6 = arith.constant 0 : index
    %c0_7 = arith.constant 0 : index
    %10 = vector.load %arg4[%c0_6, %c0_7] : memref<128x512xbf16, #tpu.memory_space<vmem>>, vector<128x512xbf16>
    %cst_8 = arith.constant dense<0.000000e+00> : vector<8x512xf32>
    %11 = tpu.matmul %9, %10, %cst_8 {dimension_numbers = #tpu.dot_dimension_numbers<[1], [0], [0], [1], [0, 0, 1, 1], [], []>} : vector<8x128xbf16>, vector<128x512xbf16>, vector<8x512xf32> -> vector<8x512xf32>
    %c0_9 = arith.constant 0 : index
    %c0_10 = arith.constant 0 : index
    %12 = vector.load %arg5[%c0_9, %c0_10] : memref<1x512xf32, #tpu.memory_space<vmem>>, vector<1x512xf32>
    %13 = vector.broadcast %12 : vector<1x512xf32> to vector<8x512xf32>
    %14 = arith.addf %11, %13 : vector<8x512xf32>
    %cst_11 = arith.constant 0.000000e+00 : f32
    %15 = vector.broadcast %cst_11 : f32 to vector<8x512xf32>
    %16 = arith.maximumf %14, %15 : vector<8x512xf32>
    %17 = arith.truncf %16 : vector<8x512xf32> to vector<8x512xbf16>
    %c0_12 = arith.constant 0 : index
    %c0_13 = arith.constant 0 : index
    %18 = vector.load %arg6[%c0_12, %c0_13] : memref<512x896xbf16, #tpu.memory_space<vmem>>, vector<512x896xbf16>
    %cst_14 = arith.constant dense<0.000000e+00> : vector<8x896xf32>
    %19 = tpu.matmul %17, %18, %cst_14 {dimension_numbers = #tpu.dot_dimension_numbers<[1], [0], [0], [1], [0, 0, 1, 1], [], []>} : vector<8x512xbf16>, vector<512x896xbf16>, vector<8x896xf32> -> vector<8x896xf32>
    %c0_15 = arith.constant 0 : index
    %c0_16 = arith.constant 0 : index
    %20 = vector.load %arg7[%c0_15, %c0_16] : memref<1x896xf32, #tpu.memory_space<vmem>>, vector<1x896xf32>
    %21 = vector.broadcast %20 : vector<1x896xf32> to vector<8x896xf32>
    %22 = arith.addf %19, %21 : vector<8x896xf32>
    %c0_17 = arith.constant 0 : index
    %c0_18 = arith.constant 0 : index
    %23 = vector.load %arg8[%c0_17, %c0_18] : memref<8x896xf32, #tpu.memory_space<vmem>>, vector<8x896xf32>
    tpu.vector_store %arg8[%c0_17, %c0_18], %22 {strides = array<i32>} : memref<8x896xf32, #tpu.memory_space<vmem>>, vector<8x896xf32>,
    return
  }
  func.func @transform_0(%arg0: i32) -> (i32, i32) {
    %c0_i32 = arith.constant 0 : i32
    %c0_i32_0 = arith.constant 0 : i32
    return %arg0, %c0_i32 : i32, i32
  }
  func.func @transform_1(%arg0: i32) -> (i32, i32) {
    %c0_i32 = arith.constant 0 : i32
    %c0_i32_0 = arith.constant 0 : i32
    %c0_i32_1 = arith.constant 0 : i32
    return %c0_i32, %c0_i32_0 : i32, i32
  }
  func.func @transform_2(%arg0: i32) -> (i32, i32) {
    %c0_i32 = arith.constant 0 : i32
    %c0_i32_0 = arith.constant 0 : i32
    %c0_i32_1 = arith.constant 0 : i32
    return %c0_i32, %c0_i32_0 : i32, i32
  }
  func.func @transform_3(%arg0: i32) -> (i32, i32) {
    %c0_i32 = arith.constant 0 : i32
    %c0_i32_0 = arith.constant 0 : i32
    %c0_i32_1 = arith.constant 0 : i32
    return %c0_i32, %c0_i32_0 : i32, i32
  }
  func.func @transform_4(%arg0: i32) -> (i32, i32) {
    %c0_i32 = arith.constant 0 : i32
    %c0_i32_0 = arith.constant 0 : i32
    %c0_i32_1 = arith.constant 0 : i32
    return %c0_i32, %c0_i32_0 : i32, i32
  }
  func.func @transform_5(%arg0: i32) -> (i32, i32) {
    %c0_i32 = arith.constant 0 : i32
    %c0_i32_0 = arith.constant 0 : i32
    %c0_i32_1 = arith.constant 0 : i32
    return %c0_i32, %c0_i32_0 : i32, i32
  }
  func.func @transform_6(%arg0: i32) -> (i32, i32) {
    %c0_i32 = arith.constant 0 : i32
    %c0_i32_0 = arith.constant 0 : i32
    %c0_i32_1 = arith.constant 0 : i32
    return %c0_i32, %c0_i32_0 : i32, i32
  }
  func.func @transform_7(%arg0: i32) -> (i32, i32) {
    %c0_i32 = arith.constant 0 : i32
    %c0_i32_0 = arith.constant 0 : i32
    return %arg0, %c0_i32 : i32, i32
  }
}

</mosaic_0001>

<llo_original>
// kernel: tpu_custom_call.1
$region0: #{tpu_custom_call.1}
  #allocation0 [shape = 'u32[]', space=smem, size = 0x4, offset = 0x4, fixed_abs, tag = 'smem constant byte address 0x4 - core index']
  #allocation1 [shape = 'u32[144,128]{1,0:T(1,128)}', space=vmem, size = 0x12000, scoped, tag = 'internal scratch']
  %s0 = inlined_call_operand.hbm [shape: f32[8,20], index: 0, kind: input, shape index: {}]
  %s1 = inlined_call_operand.hbm [shape: bf16[20,128], index: 1, kind: input, shape index: {}]
  %s2 = inlined_call_operand.vmem [shape: f32[1,128], index: 2, kind: input, shape index: {}]
  %s3 = inlined_call_operand.hbm [shape: bf16[128,512], index: 3, kind: input, shape index: {}]
  %s4 = inlined_call_operand.hbm [shape: f32[1,512], index: 4, kind: input, shape index: {}]
  %s5 = inlined_call_operand.hbm [shape: bf16[512,896], index: 5, kind: input, shape index: {}]
  %s6 = inlined_call_operand.vmem [shape: f32[1,896], index: 6, kind: input, shape index: {}]
  %s7 = inlined_call_operand.hbm [shape: f32[8,896], index: 7, kind: output, shape index: {}]
  %s8 = sld [smem:[#allocation0]]
  $region58: #{tpu_custom_call.1} parent=0
    _
  %s10 = ssub.s32 1, %s8
  %s11 = scalar_select 0, %s10, %s8
  $region1: #{tpu_custom_call.1} parent=0
    #allocation2 [shape = 'u8[4096]{0}', space=vmem, size = 0x1000, scoped, tag = 'input window, operand 0, single buffered']
    #allocation3 [shape = 's32[1]{0}', space=sflag, size = 0x4, scoped, tag = 'scoped memory for tpu_custom_call.1']
    #allocation4 [shape = 's32[1]{0}', space=sflag, size = 0x4, scoped, tag = 'scoped memory for tpu_custom_call.1']
    #allocation5 [shape = 'u8[6144]{0}', space=vmem, size = 0x1800, scoped, tag = 'input window, operand 1, single buffered']
    #allocation6 [shape = 's32[1]{0}', space=sflag, size = 0x4, scoped, tag = 'scoped memory for tpu_custom_call.1']
    #allocation7 [shape = 'u8[131072]{0}', space=vmem, size = 0x20000, scoped, tag = 'input window, operand 3, single buffered']
    #allocation8 [shape = 'u8[2048]{0}', space=vmem, size = 0x800, scoped, tag = 'input window, operand 4, single buffered']
    #allocation9 [shape = 's32[1]{0}', space=sflag, size = 0x4, scoped, tag = 'scoped memory for tpu_custom_call.1']
    #allocation10 [shape = 'u8[917504]{0}', space=vmem, size = 0xe0000, scoped, tag = 'input window, operand 5, single buffered']
    #allocation11 [shape = 'u8[28672]{0}', space=vmem, size = 0x7000, scoped, tag = 'output window, operand 0, single buffered']
    %12 = vsyncpa [#allocation3], 0
    %13 = vsyncpa [#allocation6], 0
    %14 = vsyncpa [#allocation9], 0
    %15 = vsyncpa [#allocation4], 0
    // Predicated region
    $region2: #{tpu_custom_call.1} parent=1 // pred_check
      _
    $region3: #{tpu_custom_call.1} parent=1 // pred_check_branch
      %17 = sbr.rel (0) target = $region5
    $region4: #{tpu_custom_call.1} parent=1 // pred_region
      %s19 = ssub.s32 128, 128
      %20 = vsyncadd [#allocation3], %s19
      %s22 = sshll.u32 [#allocation2], 4
      %s23 = int_to_ptr.vmem [resolvable:$true] %s22
      %25 = dma.hbm_to_vmem [thread:$0]  %s0, 128, %s23, [#allocation3]
    $region5: #{tpu_custom_call.1} parent=1 // pred_fallthru
      _
    // Predicated region
    $region6: #{tpu_custom_call.1} parent=1 // pred_check
      _
    $region7: #{tpu_custom_call.1} parent=1 // pred_check_branch
      %27 = sbr.rel (0) target = $region9
    $region8: #{tpu_custom_call.1} parent=1 // pred_region
      %s29 = ssub.s32 192, 192
      %30 = vsyncadd [#allocation6], %s29
      %s31 = sshll.u32 [#allocation5], 4
      %s32 = int_to_ptr.vmem [resolvable:$true] %s31
      %37 = dma.hbm_to_vmem [thread:$0]  %s1, 192, %s32, [#allocation6], 64, 64, 4
    $region9: #{tpu_custom_call.1} parent=1 // pred_fallthru
      _
    // Predicated region
    $region10: #{tpu_custom_call.1} parent=1 // pred_check
      _
    $region11: #{tpu_custom_call.1} parent=1 // pred_check_branch
      %39 = sbr.rel (0) target = $region13
    $region12: #{tpu_custom_call.1} parent=1 // pred_region
      _
    $region13: #{tpu_custom_call.1} parent=1 // pred_fallthru
      _
    // Predicated region
    $region14: #{tpu_custom_call.1} parent=1 // pred_check
      _
    $region15: #{tpu_custom_call.1} parent=1 // pred_check_branch
      %41 = sbr.rel (0) target = $region17
    $region16: #{tpu_custom_call.1} parent=1 // pred_region
      %s43 = ssub.s32 4096, 4096
      %44 = vsyncadd [#allocation6], %s43
      %s45 = sshll.u32 [#allocation7], 4
      %s46 = int_to_ptr.vmem [resolvable:$true] %s45
      %51 = dma.hbm_to_vmem [thread:$0]  %s3, 4096, %s46, [#allocation6], 256, 256, 16
    $region17: #{tpu_custom_call.1} parent=1 // pred_fallthru
      _
    // Predicated region
    $region18: #{tpu_custom_call.1} parent=1 // pred_check
      _
    $region19: #{tpu_custom_call.1} parent=1 // pred_check_branch
      %53 = sbr.rel (0) target = $region21
    $region20: #{tpu_custom_call.1} parent=1 // pred_region
      %s55 = ssub.s32 64, 64
      %56 = vsyncadd [#allocation9], %s55
      %s58 = sshll.u32 [#allocation8], 4
      %s59 = int_to_ptr.vmem [resolvable:$true] %s58
      %61 = dma.hbm_to_vmem [thread:$0]  %s4, 64, %s59, [#allocation9]
    $region21: #{tpu_custom_call.1} parent=1 // pred_fallthru
      _
    // Predicated region
    $region22: #{tpu_custom_call.1} parent=1 // pred_check
      _
    $region23: #{tpu_custom_call.1} parent=1 // pred_check_branch
      %63 = sbr.rel (0) target = $region25
    $region24: #{tpu_custom_call.1} parent=1 // pred_region
      %s65 = ssub.s32 28672, 28672
      %66 = vsyncadd [#allocation9], %s65
      %s67 = sshll.u32 [#allocation10], 4
      %s68 = int_to_ptr.vmem [resolvable:$true] %s67
      %73 = dma.hbm_to_vmem [thread:$0]  %s5, 28672, %s68, [#allocation9], 448, 448, 28
    $region25: #{tpu_custom_call.1} parent=1 // pred_fallthru
      _
    // Predicated region
    $region26: #{tpu_custom_call.1} parent=1 // pred_check
      _
    $region27: #{tpu_custom_call.1} parent=1 // pred_check_branch
      %75 = sbr.rel (0) target = $region29
    $region28: #{tpu_custom_call.1} parent=1 // pred_region
      _
    $region29: #{tpu_custom_call.1} parent=1 // pred_fallthru
      _
    // Predicated region
    $region30: #{tpu_custom_call.1} parent=1 // pred_check
      _
    $region31: #{tpu_custom_call.1} parent=1 // pred_check_branch
      %77 = sbr.rel (0) target = $region33
    $region32: #{tpu_custom_call.1} parent=1 // pred_region
      %78 = dma.done [#allocation3], 128
    $region33: #{tpu_custom_call.1} parent=1 // pred_fallthru
      _
    // Predicated region
    $region34: #{tpu_custom_call.1} parent=1 // pred_check
      _
    $region35: #{tpu_custom_call.1} parent=1 // pred_check_branch
      %80 = sbr.rel (0) target = $region37
    $region36: #{tpu_custom_call.1} parent=1 // pred_region
      %81 = dma.done [#allocation6], 192
    $region37: #{tpu_custom_call.1} parent=1 // pred_fallthru
      _
    // Predicated region
    $region38: #{tpu_custom_call.1} parent=1 // pred_check
      _
    $region39: #{tpu_custom_call.1} parent=1 // pred_check_branch
      %83 = sbr.rel (0) target = $region41
    $region40: #{tpu_custom_call.1} parent=1 // pred_region
      %84 = dma.done [#allocation6], 4096
    $region41: #{tpu_custom_call.1} parent=1 // pred_fallthru
      _
    // Predicated region
    $region42: #{tpu_custom_call.1} parent=1 // pred_check
      _
    $region43: #{tpu_custom_call.1} parent=1 // pred_check_branch
      %86 = sbr.rel (0) target = $region45
    $region44: #{tpu_custom_call.1} parent=1 // pred_region
      %87 = dma.done [#allocation9], 64
    $region45: #{tpu_custom_call.1} parent=1 // pred_fallthru
      _
    // Predicated region
    $region46: #{tpu_custom_call.1} parent=1 // pred_check
      _
    $region47: #{tpu_custom_call.1} parent=1 // pred_check_branch
      %89 = sbr.rel (0) target = $region49
    $region48: #{tpu_custom_call.1} parent=1 // pred_region
      %90 = dma.done [#allocation9], 28672
    $region49: #{tpu_custom_call.1} parent=1 // pred_fallthru
      _
    %v92 = vld [vmem:[#allocation2] sm:$0xff]
    %v93 = vpack.c.bf16 %v92, %v92
    %v94 = vld [vmem:[#allocation5] sm:$0xf]
    %v95 = vld [vmem:[#allocation5 + $0x4] sm:$0xf]
    %v96 = vld [vmem:[#allocation5 + $0x8] sm:$0x3]
    %v97 = vld [vmem:[%s2] sm:$0x1]
    %v99 = vlaneseq
    %v100 = vshrl.u32 %v99, 7
    %v101 = vsub.s32 0, %v100
    %v102 = vrot.slane %v97, %v101
    %v107 = vunpack.c.l.b16 %v94
    %v108 = vunpack.c.l.b16 %v95
    %v109 = vunpack.c.l.b16 %v96
    %v110 = vpack.c.b16 %v108, %v107
    %v111 = vpack.c.b16 %v109, %v109
    %vm113 = vcmask 162816
    %v115 = vsel %vm113, %v93, 0
    %vm117 = vcmask 1041408
    %v119 = vsel %vm117, %v111, 0
    %121 = vmatprep.subr.bf16.mxu0 0
    %122 = vmatpush1.bf16.msra.mxu0 0
    %123 = vmatprep.subr.bf16.mxu0 0
    %124 = vmatpush1.bf16.msra.mxu0 0
    %125 = vmatprep.subr.bf16.mxu0 0
    %126 = vmatpush1.bf16.msra.mxu0 0
    %127 = vmatprep.subr.bf16.mxu0 0
    %128 = vmatpush1.bf16.msra.mxu0 0
    %129 = vmatprep.subr.bf16.mxu0 0
    %130 = vmatpush1.bf16.msra.mxu0 0
    %131 = vmatprep.subr.bf16.mxu0 0
    %132 = vmatpush1.bf16.msra.mxu0 0
    %133 = vmatprep.subr.bf16.mxu0 0
    %134 = vmatpush1.bf16.msra.mxu0 %v119
    %135 = vmatprep.subr.bf16.mxu0 0
    %136 = vmatpush1.bf16.msra.mxu0 %v110
    %137 = vmatprep.subr.bf16.mxu0 0
    %138 = vmatpush2.bf16.msra.mxu0 0
    %139 = vmatprep.subr.bf16.mxu0 0
    %140 = vmatpush2.bf16.msra.mxu0 0
    %141 = vmatprep.subr.bf16.mxu0 0
    %142 = vmatpush2.bf16.msra.mxu0 0
    %143 = vmatprep.subr.bf16.mxu0 0
    %144 = vmatpush2.bf16.msra.mxu0 0
    %145 = vmatprep.subr.bf16.mxu0 0
    %146 = vmatpush2.bf16.msra.mxu0 0
    %147 = vmatprep.subr.bf16.mxu0 0
    %148 = vmatpush2.bf16.msra.mxu0 0
    %149 = vmatprep.subr.bf16.mxu0 0
    %150 = vmatpush2.bf16.msra.mxu0 0
    %151 = vmatprep.subr.bf16.mxu0 0
    %152 = vmatpush2.bf16.msra.mxu0 0
    %153 = vmatprep.mubr.bf16.mxu0 0
    %154 = vmatmul.mubr.bf16.gmra.mxu0 %v115
    %v155 = vpop.f32.mrf.mxu0
    %v156 = vadd.f32 %v102, %v155
    %v157 = vpop.f32.mrf.mxu0
    %v158 = vpop.f32.mrf.mxu0
    %v159 = vpop.f32.mrf.mxu0
    %160 = vdwg.mxu0
    %v161 = vmax.f32 %v156, 0.0
    %v162 = vpack.c.bf16 %v161, %v161
    %v163 = vld [vmem:[#allocation7] sm:$0xff]
    %v164 = vld [vmem:[#allocation7 + $0x8] sm:$0xff]
    %v165 = vld [vmem:[#allocation7 + $0x10] sm:$0xff]
    %v166 = vld [vmem:[#allocation7 + $0x18] sm:$0xff]
    %v167 = vld [vmem:[#allocation7 + $0x20] sm:$0xff]
    %v168 = vld [vmem:[#allocation7 + $0x28] sm:$0xff]
    %v169 = vld [vmem:[#allocation7 + $0x30] sm:$0xff]
    %v170 = vld [vmem:[#allocation7 + $0x38] sm:$0xff]
    %v171 = vld [vmem:[#allocation7 + $0x40] sm:$0xff]
    %v172 = vld [vmem:[#allocation7 + $0x48] sm:$0xff]
    %v173 = vld [vmem:[#allocation7 + $0x50] sm:$0xff]
    %v174 = vld [vmem:[#allocation7 + $0x58] sm:$0xff]
    %v175 = vld [vmem:[#allocation7 + $0x60] sm:$0xff]
    %v176 = vld [vmem:[#allocation7 + $0x68] sm:$0xff]
    %v177 = vld [vmem:[#allocation7 + $0x70] sm:$0xff]
    %v178 = vld [vmem:[#allocation7 + $0x78] sm:$0xff]
    %v179 = vld [vmem:[#allocation7 + $0x80] sm:$0xff]
    %v180 = vld [vmem:[#allocation7 + $0x88] sm:$0xff]
    %v181 = vld [vmem:[#allocation7 + $0x90] sm:$0xff]
    %v182 = vld [vmem:[#allocation7 + $0x98] sm:$0xff]
    %v183 = vld [vmem:[#allocation7 + $0xa0] sm:$0xff]
    %v184 = vld [vmem:[#allocation7 + $0xa8] sm:$0xff]
    %v185 = vld [vmem:[#allocation7 + $0xb0] sm:$0xff]
    %v186 = vld [vmem:[#allocation7 + $0xb8] sm:$0xff]
    %v187 = vld [vmem:[#allocation7 + $0xc0] sm:$0xff]
    %v188 = vld [vmem:[#allocation7 + $0xc8] sm:$0xff]
    %v189 = vld [vmem:[#allocation7 + $0xd0] sm:$0xff]
    %v190 = vld [vmem:[#allocation7 + $0xd8] sm:$0xff]
    %v191 = vld [vmem:[#allocation7 + $0xe0] sm:$0xff]
    %v192 = vld [vmem:[#allocation7 + $0xe8] sm:$0xff]
    %v193 = vld [vmem:[#allocation7 + $0xf0] sm:$0xff]
    %v194 = vld [vmem:[#allocation7 + $0xf8] sm:$0xff]
    %v195 = vld [vmem:[#allocation8] sm:$0xf]
    %v197 = vlaneseq
    %v198 = vshrl.u32 %v197, 7
    %v199 = vsub.s32 0, %v198
    %v200 = vrot.slane %v195, %v199
    %v201 = vlaneseq
    %v202 = vshrl.u32 %v201, 7
    %v203 = vsub.s32 1, %v202
    %v204 = vrot.slane %v195, %v203
    %v205 = vlaneseq
    %v206 = vshrl.u32 %v205, 7
    %v207 = vsub.s32 2, %v206
    %v208 = vrot.slane %v195, %v207
    %v209 = vlaneseq
    %v210 = vshrl.u32 %v209, 7
    %v211 = vsub.s32 3, %v210
    %v212 = vrot.slane %v195, %v211
    %v249 = vunpack.c.l.b16 %v163
    %v250 = vunpack.c.h.b16 %v163
    %v251 = vunpack.c.l.b16 %v164
    %v252 = vunpack.c.h.b16 %v164
    %v253 = vunpack.c.l.b16 %v165
    %v254 = vunpack.c.h.b16 %v165
    %v255 = vunpack.c.l.b16 %v166
    %v256 = vunpack.c.h.b16 %v166
    %v257 = vunpack.c.l.b16 %v167
    %v258 = vunpack.c.h.b16 %v167
    %v259 = vunpack.c.l.b16 %v168
    %v260 = vunpack.c.h.b16 %v168
    %v261 = vunpack.c.l.b16 %v169
    %v262 = vunpack.c.h.b16 %v169
    %v263 = vunpack.c.l.b16 %v170
    %v264 = vunpack.c.h.b16 %v170
    %v265 = vunpack.c.l.b16 %v171
    %v266 = vunpack.c.h.b16 %v171
    %v267 = vunpack.c.l.b16 %v172
    %v268 = vunpack.c.h.b16 %v172
    %v269 = vunpack.c.l.b16 %v173
    %v270 = vunpack.c.h.b16 %v173
    %v271 = vunpack.c.l.b16 %v174
    %v272 = vunpack.c.h.b16 %v174
    %v273 = vunpack.c.l.b16 %v175
    %v274 = vunpack.c.h.b16 %v175
    %v275 = vunpack.c.l.b16 %v176
    %v276 = vunpack.c.h.b16 %v176
    %v277 = vunpack.c.l.b16 %v177
    %v278 = vunpack.c.h.b16 %v177
    %v279 = vunpack.c.l.b16 %v178
    %v280 = vunpack.c.h.b16 %v178
    %v281 = vunpack.c.l.b16 %v179
    %v282 = vunpack.c.h.b16 %v179
    %v283 = vunpack.c.l.b16 %v180
    %v284 = vunpack.c.h.b16 %v180
    %v285 = vunpack.c.l.b16 %v181
    %v286 = vunpack.c.h.b16 %v181
    %v287 = vunpack.c.l.b16 %v182
    %v288 = vunpack.c.h.b16 %v182
    %v289 = vunpack.c.l.b16 %v183
    %v290 = vunpack.c.h.b16 %v183
    %v291 = vunpack.c.l.b16 %v184
    %v292 = vunpack.c.h.b16 %v184
    %v293 = vunpack.c.l.b16 %v185
    %v294 = vunpack.c.h.b16 %v185
    %v295 = vunpack.c.l.b16 %v186
    %v296 = vunpack.c.h.b16 %v186
    %v297 = vunpack.c.l.b16 %v187
    %v298 = vunpack.c.h.b16 %v187
    %v299 = vunpack.c.l.b16 %v188
    %v300 = vunpack.c.h.b16 %v188
    %v301 = vunpack.c.l.b16 %v189
    %v302 = vunpack.c.h.b16 %v189
    %v303 = vunpack.c.l.b16 %v190
    %v304 = vunpack.c.h.b16 %v190
    %v305 = vunpack.c.l.b16 %v191
    %v306 = vunpack.c.h.b16 %v191
    %v307 = vunpack.c.l.b16 %v192
    %v308 = vunpack.c.h.b16 %v192
    %v309 = vunpack.c.l.b16 %v193
    %v310 = vunpack.c.h.b16 %v193
    %v311 = vunpack.c.l.b16 %v194
    %v312 = vunpack.c.h.b16 %v194
    %v313 = vpack.c.b16 %v253, %v249
    %v314 = vpack.c.b16 %v254, %v250
    %v315 = vpack.c.b16 %v255, %v251
    %v316 = vpack.c.b16 %v256, %v252
    %v317 = vpack.c.b16 %v261, %v257
    %v318 = vpack.c.b16 %v262, %v258
    %v319 = vpack.c.b16 %v263, %v259
    %v320 = vpack.c.b16 %v264, %v260
    %v321 = vpack.c.b16 %v269, %v265
    %v322 = vpack.c.b16 %v270, %v266
    %v323 = vpack.c.b16 %v271, %v267
    %v324 = vpack.c.b16 %v272, %v268
    %v325 = vpack.c.b16 %v277, %v273
    %v326 = vpack.c.b16 %v278, %v274
    %v327 = vpack.c.b16 %v279, %v275
    %v328 = vpack.c.b16 %v280, %v276
    %v329 = vpack.c.b16 %v285, %v281
    %v330 = vpack.c.b16 %v286, %v282
    %v331 = vpack.c.b16 %v287, %v283
    %v332 = vpack.c.b16 %v288, %v284
    %v333 = vpack.c.b16 %v293, %v289
    %v334 = vpack.c.b16 %v294, %v290
    %v335 = vpack.c.b16 %v295, %v291
    %v336 = vpack.c.b16 %v296, %v292
    %v337 = vpack.c.b16 %v301, %v297
    %v338 = vpack.c.b16 %v302, %v298
    %v339 = vpack.c.b16 %v303, %v299
    %v340 = vpack.c.b16 %v304, %v300
    %v341 = vpack.c.b16 %v309, %v305
    %v342 = vpack.c.b16 %v310, %v306
    %v343 = vpack.c.b16 %v311, %v307
    %v344 = vpack.c.b16 %v312, %v308
    %377 = vmatprep.subr.bf16.mxu0 %v342
    %378 = vmatpush1.bf16.msra.mxu0 %v341
    %379 = vmatprep.subr.bf16.mxu0 %v338
    %380 = vmatpush1.bf16.msra.mxu0 %v337
    %381 = vmatprep.subr.bf16.mxu0 %v334
    %382 = vmatpush1.bf16.msra.mxu0 %v333
    %383 = vmatprep.subr.bf16.mxu0 %v330
    %384 = vmatpush1.bf16.msra.mxu0 %v329
    %385 = vmatprep.subr.bf16.mxu0 %v326
    %386 = vmatpush1.bf16.msra.mxu0 %v325
    %387 = vmatprep.subr.bf16.mxu0 %v322
    %388 = vmatpush1.bf16.msra.mxu0 %v321
    %389 = vmatprep.subr.bf16.mxu0 %v318
    %390 = vmatpush1.bf16.msra.mxu0 %v317
    %391 = vmatprep.subr.bf16.mxu0 %v314
    %392 = vmatpush1.bf16.msra.mxu0 %v313
    %393 = vmatprep.subr.bf16.mxu0 0
    %394 = vmatpush2.bf16.msra.mxu0 0
    %395 = vmatprep.subr.bf16.mxu0 0
    %396 = vmatpush2.bf16.msra.mxu0 0
    %397 = vmatprep.subr.bf16.mxu0 0
    %398 = vmatpush2.bf16.msra.mxu0 0
    %399 = vmatprep.subr.bf16.mxu0 0
    %400 = vmatpush2.bf16.msra.mxu0 0
    %401 = vmatprep.subr.bf16.mxu0 0
    %402 = vmatpush2.bf16.msra.mxu0 0
    %403 = vmatprep.subr.bf16.mxu0 0
    %404 = vmatpush2.bf16.msra.mxu0 0
    %405 = vmatprep.subr.bf16.mxu0 0
    %406 = vmatpush2.bf16.msra.mxu0 0
    %407 = vmatprep.subr.bf16.mxu0 0
    %408 = vmatpush2.bf16.msra.mxu0 0
    %409 = vmatprep.mubr.bf16.mxu0 0
    %410 = vmatmul.mubr.bf16.gmra.mxu0 %v162
    %v411 = vpop.f32.mrf.mxu0
    %v412 = vadd.f32 %v200, %v411
    %v413 = vpop.f32.mrf.mxu0
    %v414 = vadd.f32 %v204, %v413
    %v415 = vpop.f32.mrf.mxu0
    %v416 = vpop.f32.mrf.mxu0
    %417 = vdwg.mxu0
    %418 = vmatprep.subr.bf16.mxu0 %v344
    %419 = vmatpush1.bf16.msra.mxu0 %v343
    %420 = vmatprep.subr.bf16.mxu0 %v340
    %421 = vmatpush1.bf16.msra.mxu0 %v339
    %422 = vmatprep.subr.bf16.mxu0 %v336
    %423 = vmatpush1.bf16.msra.mxu0 %v335
    %424 = vmatprep.subr.bf16.mxu0 %v332
    %425 = vmatpush1.bf16.msra.mxu0 %v331
    %426 = vmatprep.subr.bf16.mxu0 %v328
    %427 = vmatpush1.bf16.msra.mxu0 %v327
    %428 = vmatprep.subr.bf16.mxu0 %v324
    %429 = vmatpush1.bf16.msra.mxu0 %v323
    %430 = vmatprep.subr.bf16.mxu0 %v320
    %431 = vmatpush1.bf16.msra.mxu0 %v319
    %432 = vmatprep.subr.bf16.mxu0 %v316
    %433 = vmatpush1.bf16.msra.mxu0 %v315
    %434 = vmatprep.subr.bf16.mxu0 0
    %435 = vmatpush2.bf16.msra.mxu0 0
    %436 = vmatprep.subr.bf16.mxu0 0
    %437 = vmatpush2.bf16.msra.mxu0 0
    %438 = vmatprep.subr.bf16.mxu0 0
    %439 = vmatpush2.bf16.msra.mxu0 0
    %440 = vmatprep.subr.bf16.mxu0 0
    %441 = vmatpush2.bf16.msra.mxu0 0
    %442 = vmatprep.subr.bf16.mxu0 0
    %443 = vmatpush2.bf16.msra.mxu0 0
    %444 = vmatprep.subr.bf16.mxu0 0
    %445 = vmatpush2.bf16.msra.mxu0 0
    %446 = vmatprep.subr.bf16.mxu0 0
    %447 = vmatpush2.bf16.msra.mxu0 0
    %448 = vmatprep.subr.bf16.mxu0 0
    %449 = vmatpush2.bf16.msra.mxu0 0
    %450 = vmatprep.mubr.bf16.mxu0 0
    %451 = vmatmul.mubr.bf16.gmra.mxu0 %v162
    %v452 = vpop.f32.mrf.mxu0
    %v453 = vadd.f32 %v208, %v452
    %v454 = vpop.f32.mrf.mxu0
    %v455 = vadd.f32 %v212, %v454
    %v456 = vpop.f32.mrf.mxu0
    %v457 = vpop.f32.mrf.mxu0
    %458 = vdwg.mxu0
    %v459 = vmax.f32 %v412, 0.0
    %v460 = vmax.f32 %v414, 0.0
    %v461 = vmax.f32 %v453, 0.0
    %v462 = vmax.f32 %v455, 0.0
    %v463 = vpack.c.bf16 %v459, %v459
    %v464 = vpack.c.bf16 %v460, %v460
    %v465 = vpack.c.bf16 %v461, %v461
    %v466 = vpack.c.bf16 %v462, %v462
    %v467 = vld [vmem:[#allocation10] sm:$0xff]
    %v468 = vld [vmem:[#allocation10 + $0x8] sm:$0xff]
    %v469 = vld [vmem:[#allocation10 + $0x10] sm:$0xff]
    %v470 = vld [vmem:[#allocation10 + $0x18] sm:$0xf]
    %v471 = vld [vmem:[#allocation10 + $0x1c] sm:$0xff]
    %v472 = vld [vmem:[#allocation10 + $0x24] sm:$0xff]
    %v473 = vld [vmem:[#allocation10 + $0x2c] sm:$0xff]
    %v474 = vld [vmem:[#allocation10 + $0x34] sm:$0xf]
    %v475 = vld [vmem:[#allocation10 + $0x38] sm:$0xff]
    %v476 = vld [vmem:[#allocation10 + $0x40] sm:$0xff]
    %v477 = vld [vmem:[#allocation10 + $0x48] sm:$0xff]
    %v478 = vld [vmem:[#allocation10 + $0x50] sm:$0xf]
    %v479 = vld [vmem:[#allocation10 + $0x54] sm:$0xff]
    %v480 = vld [vmem:[#allocation10 + $0x5c] sm:$0xff]
    %v481 = vld [vmem:[#allocation10 + $0x64] sm:$0xff]
    %v482 = vld [vmem:[#allocation10 + $0x6c] sm:$0xf]
    %v483 = vld [vmem:[#allocation10 + $0x70] sm:$0xff]
    %v484 = vld [vmem:[#allocation10 + $0x78] sm:$0xff]
    %v485 = vld [vmem:[#allocation10 + $0x80] sm:$0xff]
    %v486 = vld [vmem:[#allocation10 + $0x88] sm:$0xf]
    %v487 = vld [vmem:[#allocation10 + $0x8c] sm:$0xff]
    %v488 = vld [vmem:[#allocation10 + $0x94] sm:$0xff]
    %v489 = vld [vmem:[#allocation10 + $0x9c] sm:$0xff]
    %v490 = vld [vmem:[#allocation10 + $0xa4] sm:$0xf]
    %v491 = vld [vmem:[#allocation10 + $0xa8] sm:$0xff]
    %v492 = vld [vmem:[#allocation10 + $0xb0] sm:$0xff]
    %v493 = vld [vmem:[#allocation10 + $0xb8] sm:$0xff]
    %v494 = vld [vmem:[#allocation10 + $0xc0] sm:$0xf]
    %v495 = vld [vmem:[#allocation10 + $0xc4] sm:$0xff]
    %v496 = vld [vmem:[#allocation10 + $0xcc] sm:$0xff]
    %v497 = vld [vmem:[#allocation10 + $0xd4] sm:$0xff]
    %v498 = vld [vmem:[#allocation10 + $0xdc] sm:$0xf]
    %v499 = vld [vmem:[#allocation10 + $0xe0] sm:$0xff]
    %v500 = vld [vmem:[#allocation10 + $0xe8] sm:$0xff]
    %v501 = vld [vmem:[#allocation10 + $0xf0] sm:$0xff]
    %v502 = vld [vmem:[#allocation10 + $0xf8] sm:$0xf]
    %v503 = vld [vmem:[#allocation10 + $0xfc] sm:$0xff]
    %v504 = vld [vmem:[#allocation10 + $0x104] sm:$0xff]
    %v505 = vld [vmem:[#allocation10 + $0x10c] sm:$0xff]
    %v506 = vld [vmem:[#allocation10 + $0x114] sm:$0xf]
    %v507 = vld [vmem:[#allocation10 + $0x118] sm:$0xff]
    %v508 = vld [vmem:[#allocation10 + $0x120] sm:$0xff]
    %v509 = vld [vmem:[#allocation10 + $0x128] sm:$0xff]
    %v510 = vld [vmem:[#allocation10 + $0x130] sm:$0xf]
    %v511 = vld [vmem:[#allocation10 + $0x134] sm:$0xff]
    %v512 = vld [vmem:[#allocation10 + $0x13c] sm:$0xff]
    %v513 = vld [vmem:[#allocation10 + $0x144] sm:$0xff]
    %v514 = vld [vmem:[#allocation10 + $0x14c] sm:$0xf]
    %v515 = vld [vmem:[#allocation10 + $0x150] sm:$0xff]
    %v516 = vld [vmem:[#allocation10 + $0x158] sm:$0xff]
    %v517 = vld [vmem:[#allocation10 + $0x160] sm:$0xff]
    %v518 = vld [vmem:[#allocation10 + $0x168] sm:$0xf]
    %v519 = vld [vmem:[#allocation10 + $0x16c] sm:$0xff]
    %v520 = vld [vmem:[#allocation10 + $0x174] sm:$0xff]
    %v521 = vld [vmem:[#allocation10 + $0x17c] sm:$0xff]
    %v522 = vld [vmem:[#allocation10 + $0x184] sm:$0xf]
    %v523 = vld [vmem:[#allocation10 + $0x188] sm:$0xff]
    %v524 = vld [vmem:[#allocation10 + $0x190] sm:$0xff]
    %v525 = vld [vmem:[#allocation10 + $0x198] sm:$0xff]
    %v526 = vld [vmem:[#allocation10 + $0x1a0] sm:$0xf]
    %v527 = vld [vmem:[#allocation10 + $0x1a4] sm:$0xff]
    %v528 = vld [vmem:[#allocation10 + $0x1ac] sm:$0xff]
    %v529 = vld [vmem:[#allocation10 + $0x1b4] sm:$0xff]
    %v530 = vld [vmem:[#allocation10 + $0x1bc] sm:$0xf]
    %v531 = vld [vmem:[#allocation10 + $0x1c0] sm:$0xff]
    %v532 = vld [vmem:[#allocation10 + $0x1c8] sm:$0xff]
    %v533 = vld [vmem:[#allocation10 + $0x1d0] sm:$0xff]
    %v534 = vld [vmem:[#allocation10 + $0x1d8] sm:$0xf]
    %v535 = vld [vmem:[#allocation10 + $0x1dc] sm:$0xff]
    %v536 = vld [vmem:[#allocation10 + $0x1e4] sm:$0xff]
    %v537 = vld [vmem:[#allocation10 + $0x1ec] sm:$0xff]
    %v538 = vld [vmem:[#allocation10 + $0x1f4] sm:$0xf]
    %v539 = vld [vmem:[#allocation10 + $0x1f8] sm:$0xff]
    %v540 = vld [vmem:[#allocation10 + $0x200] sm:$0xff]
    %v541 = vld [vmem:[#allocation10 + $0x208] sm:$0xff]
    %v542 = vld [vmem:[#allocation10 + $0x210] sm:$0xf]
    %v543 = vld [vmem:[#allocation10 + $0x214] sm:$0xff]
    %v544 = vld [vmem:[#allocation10 + $0x21c] sm:$0xff]
    %v545 = vld [vmem:[#allocation10 + $0x224] sm:$0xff]
    %v546 = vld [vmem:[#allocation10 + $0x22c] sm:$0xf]
    %v547 = vld [vmem:[#allocation10 + $0x230] sm:$0xff]
    %v548 = vld [vmem:[#allocation10 + $0x238] sm:$0xff]
    %v549 = vld [vmem:[#allocation10 + $0x240] sm:$0xff]
    %v550 = vld [vmem:[#allocation10 + $0x248] sm:$0xf]
    %v551 = vld [vmem:[#allocation10 + $0x24c] sm:$0xff]
    %v552 = vld [vmem:[#allocation10 + $0x254] sm:$0xff]
    %v553 = vld [vmem:[#allocation10 + $0x25c] sm:$0xff]
    %v554 = vld [vmem:[#allocation10 + $0x264] sm:$0xf]
    %v555 = vld [vmem:[#allocation10 + $0x268] sm:$0xff]
    %v556 = vld [vmem:[#allocation10 + $0x270] sm:$0xff]
    %v557 = vld [vmem:[#allocation10 + $0x278] sm:$0xff]
    %v558 = vld [vmem:[#allocation10 + $0x280] sm:$0xf]
    %v559 = vld [vmem:[#allocation10 + $0x284] sm:$0xff]
    %v560 = vld [vmem:[#allocation10 + $0x28c] sm:$0xff]
    %v561 = vld [vmem:[#allocation10 + $0x294] sm:$0xff]
    %v562 = vld [vmem:[#allocation10 + $0x29c] sm:$0xf]
    %v563 = vld [vmem:[#allocation10 + $0x2a0] sm:$0xff]
    %v564 = vld [vmem:[#allocation10 + $0x2a8] sm:$0xff]
    %v565 = vld [vmem:[#allocation10 + $0x2b0] sm:$0xff]
    %v566 = vld [vmem:[#allocation10 + $0x2b8] sm:$0xf]
    %v567 = vld [vmem:[#allocation10 + $0x2bc] sm:$0xff]
    %v568 = vld [vmem:[#allocation10 + $0x2c4] sm:$0xff]
    %v569 = vld [vmem:[#allocation10 + $0x2cc] sm:$0xff]
    %v570 = vld [vmem:[#allocation10 + $0x2d4] sm:$0xf]
    %v571 = vld [vmem:[#allocation10 + $0x2d8] sm:$0xff]
    %v572 = vld [vmem:[#allocation10 + $0x2e0] sm:$0xff]
    %v573 = vld [vmem:[#allocation10 + $0x2e8] sm:$0xff]
    %v574 = vld [vmem:[#allocation10 + $0x2f0] sm:$0xf]
    %v575 = vld [vmem:[#allocation10 + $0x2f4] sm:$0xff]
    %v576 = vld [vmem:[#allocation10 + $0x2fc] sm:$0xff]
    %v577 = vld [vmem:[#allocation10 + $0x304] sm:$0xff]
    %v578 = vld [vmem:[#allocation10 + $0x30c] sm:$0xf]
    %v579 = vld [vmem:[#allocation10 + $0x310] sm:$0xff]
    %v580 = vld [vmem:[#allocation10 + $0x318] sm:$0xff]
    %v581 = vld [vmem:[#allocation10 + $0x320] sm:$0xff]
    %v582 = vld [vmem:[#allocation10 + $0x328] sm:$0xf]
    %v583 = vld [vmem:[#allocation10 + $0x32c] sm:$0xff]
    %v584 = vld [vmem:[#allocation10 + $0x334] sm:$0xff]
    %v585 = vld [vmem:[#allocation10 + $0x33c] sm:$0xff]
    %v586 = vld [vmem:[#allocation10 + $0x344] sm:$0xf]
    %v587 = vld [vmem:[#allocation10 + $0x348] sm:$0xff]
    %v588 = vld [vmem:[#allocation10 + $0x350] sm:$0xff]
    %v589 = vld [vmem:[#allocation10 + $0x358] sm:$0xff]
    %v590 = vld [vmem:[#allocation10 + $0x360] sm:$0xf]
    %v591 = vld [vmem:[#allocation10 + $0x364] sm:$0xff]
    %v592 = vld [vmem:[#allocation10 + $0x36c] sm:$0xff]
    %v593 = vld [vmem:[#allocation10 + $0x374] sm:$0xff]
    %v594 = vld [vmem:[#allocation10 + $0x37c] sm:$0xf]
    %v595 = vld [vmem:[#allocation10 + $0x380] sm:$0xff]
    %v596 = vld [vmem:[#allocation10 + $0x388] sm:$0xff]
    %v597 = vld [vmem:[#allocation10 + $0x390] sm:$0xff]
    %v598 = vld [vmem:[#allocation10 + $0x398] sm:$0xf]
    %v599 = vld [vmem:[#allocation10 + $0x39c] sm:$0xff]
    %v600 = vld [vmem:[#allocation10 + $0x3a4] sm:$0xff]
    %v601 = vld [vmem:[#allocation10 + $0x3ac] sm:$0xff]
    %v602 = vld [vmem:[#allocation10 + $0x3b4] sm:$0xf]
    %v603 = vld [vmem:[#allocation10 + $0x3b8] sm:$0xff]
    %v604 = vld [vmem:[#allocation10 + $0x3c0] sm:$0xff]
    %v605 = vld [vmem:[#allocation10 + $0x3c8] sm:$0xff]
    %v606 = vld [vmem:[#allocation10 + $0x3d0] sm:$0xf]
    %v607 = vld [vmem:[#allocation10 + $0x3d4] sm:$0xff]
    %v608 = vld [vmem:[#allocation10 + $0x3dc] sm:$0xff]
    %v609 = vld [vmem:[#allocation10 + $0x3e4] sm:$0xff]
    %v610 = vld [vmem:[#allocation10 + $0x3ec] sm:$0xf]
    %v611 = vld [vmem:[#allocation10 + $0x3f0] sm:$0xff]
    %v612 = vld [vmem:[#allocation10 + $0x3f8] sm:$0xff]
    %v613 = vld [vmem:[#allocation10 + $0x400] sm:$0xff]
    %v614 = vld [vmem:[#allocation10 + $0x408] sm:$0xf]
    %v615 = vld [vmem:[#allocation10 + $0x40c] sm:$0xff]
    %v616 = vld [vmem:[#allocation10 + $0x414] sm:$0xff]
    %v617 = vld [vmem:[#allocation10 + $0x41c] sm:$0xff]
    %v618 = vld [vmem:[#allocation10 + $0x424] sm:$0xf]
    %v619 = vld [vmem:[#allocation10 + $0x428] sm:$0xff]
    %v620 = vld [vmem:[#allocation10 + $0x430] sm:$0xff]
    %v621 = vld [vmem:[#allocation10 + $0x438] sm:$0xff]
    %v622 = vld [vmem:[#allocation10 + $0x440] sm:$0xf]
    %v623 = vld [vmem:[#allocation10 + $0x444] sm:$0xff]
    %v624 = vld [vmem:[#allocation10 + $0x44c] sm:$0xff]
    %v625 = vld [vmem:[#allocation10 + $0x454] sm:$0xff]
    %v626 = vld [vmem:[#allocation10 + $0x45c] sm:$0xf]
    %v627 = vld [vmem:[#allocation10 + $0x460] sm:$0xff]
    %v628 = vld [vmem:[#allocation10 + $0x468] sm:$0xff]
    %v629 = vld [vmem:[#allocation10 + $0x470] sm:$0xff]
    %v630 = vld [vmem:[#allocation10 + $0x478] sm:$0xf]
    %v631 = vld [vmem:[#allocation10 + $0x47c] sm:$0xff]
    %v632 = vld [vmem:[#allocation10 + $0x484] sm:$0xff]
    %v633 = vld [vmem:[#allocation10 + $0x48c] sm:$0xff]
    %v634 = vld [vmem:[#allocation10 + $0x494] sm:$0xf]
    %v635 = vld [vmem:[#allocation10 + $0x498] sm:$0xff]
    %v636 = vld [vmem:[#allocation10 + $0x4a0] sm:$0xff]
    %v637 = vld [vmem:[#allocation10 + $0x4a8] sm:$0xff]
    %v638 = vld [vmem:[#allocation10 + $0x4b0] sm:$0xf]
    %v639 = vld [vmem:[#allocation10 + $0x4b4] sm:$0xff]
    %v640 = vld [vmem:[#allocation10 + $0x4bc] sm:$0xff]
    %v641 = vld [vmem:[#allocation10 + $0x4c4] sm:$0xff]
    %v642 = vld [vmem:[#allocation10 + $0x4cc] sm:$0xf]
    %v643 = vld [vmem:[#allocation10 + $0x4d0] sm:$0xff]
    %v644 = vld [vmem:[#allocation10 + $0x4d8] sm:$0xff]
    %v645 = vld [vmem:[#allocation10 + $0x4e0] sm:$0xff]
    %v646 = vld [vmem:[#allocation10 + $0x4e8] sm:$0xf]
    %v647 = vld [vmem:[#allocation10 + $0x4ec] sm:$0xff]
    %v648 = vld [vmem:[#allocation10 + $0x4f4] sm:$0xff]
    %v649 = vld [vmem:[#allocation10 + $0x4fc] sm:$0xff]
    %v650 = vld [vmem:[#allocation10 + $0x504] sm:$0xf]
    %v651 = vld [vmem:[#allocation10 + $0x508] sm:$0xff]
    %v652 = vld [vmem:[#allocation10 + $0x510] sm:$0xff]
    %v653 = vld [vmem:[#allocation10 + $0x518] sm:$0xff]
    %v654 = vld [vmem:[#allocation10 + $0x520] sm:$0xf]
    %v655 = vld [vmem:[#allocation10 + $0x524] sm:$0xff]
    %v656 = vld [vmem:[#allocation10 + $0x52c] sm:$0xff]
    %v657 = vld [vmem:[#allocation10 + $0x534] sm:$0xff]
    %v658 = vld [vmem:[#allocation10 + $0x53c] sm:$0xf]
    %v659 = vld [vmem:[#allocation10 + $0x540] sm:$0xff]
    %v660 = vld [vmem:[#allocation10 + $0x548] sm:$0xff]
    %v661 = vld [vmem:[#allocation10 + $0x550] sm:$0xff]
    %v662 = vld [vmem:[#allocation10 + $0x558] sm:$0xf]
    %v663 = vld [vmem:[#allocation10 + $0x55c] sm:$0xff]
    %v664 = vld [vmem:[#allocation10 + $0x564] sm:$0xff]
    %v665 = vld [vmem:[#allocation10 + $0x56c] sm:$0xff]
    %v666 = vld [vmem:[#allocation10 + $0x574] sm:$0xf]
    %v667 = vld [vmem:[#allocation10 + $0x578] sm:$0xff]
    %v668 = vld [vmem:[#allocation10 + $0x580] sm:$0xff]
    %v669 = vld [vmem:[#allocation10 + $0x588] sm:$0xff]
    %v670 = vld [vmem:[#allocation10 + $0x590] sm:$0xf]
    %v671 = vld [vmem:[#allocation10 + $0x594] sm:$0xff]
    %v672 = vld [vmem:[#allocation10 + $0x59c] sm:$0xff]
    %v673 = vld [vmem:[#allocation10 + $0x5a4] sm:$0xff]
    %v674 = vld [vmem:[#allocation10 + $0x5ac] sm:$0xf]
    %v675 = vld [vmem:[#allocation10 + $0x5b0] sm:$0xff]
    %v676 = vld [vmem:[#allocation10 + $0x5b8] sm:$0xff]
    %v677 = vld [vmem:[#allocation10 + $0x5c0] sm:$0xff]
    %v678 = vld [vmem:[#allocation10 + $0x5c8] sm:$0xf]
    %v679 = vld [vmem:[#allocation10 + $0x5cc] sm:$0xff]
    %v680 = vld [vmem:[#allocation10 + $0x5d4] sm:$0xff]
    %v681 = vld [vmem:[#allocation10 + $0x5dc] sm:$0xff]
    %v682 = vld [vmem:[#allocation10 + $0x5e4] sm:$0xf]
    %v683 = vld [vmem:[#allocation10 + $0x5e8] sm:$0xff]
    %v684 = vld [vmem:[#allocation10 + $0x5f0] sm:$0xff]
    %v685 = vld [vmem:[#allocation10 + $0x5f8] sm:$0xff]
    %v686 = vld [vmem:[#allocation10 + $0x600] sm:$0xf]
    %v687 = vld [vmem:[#allocation10 + $0x604] sm:$0xff]
    %v688 = vld [vmem:[#allocation10 + $0x60c] sm:$0xff]
    %v689 = vld [vmem:[#allocation10 + $0x614] sm:$0xff]
    %v690 = vld [vmem:[#allocation10 + $0x61c] sm:$0xf]
    %v691 = vld [vmem:[#allocation10 + $0x620] sm:$0xff]
    %v692 = vld [vmem:[#allocation10 + $0x628] sm:$0xff]
    %v693 = vld [vmem:[#allocation10 + $0x630] sm:$0xff]
    %v694 = vld [vmem:[#allocation10 + $0x638] sm:$0xf]
    %v695 = vld [vmem:[#allocation10 + $0x63c] sm:$0xff]
    %v696 = vld [vmem:[#allocation10 + $0x644] sm:$0xff]
    %v697 = vld [vmem:[#allocation10 + $0x64c] sm:$0xff]
    %v698 = vld [vmem:[#allocation10 + $0x654] sm:$0xf]
    %v699 = vld [vmem:[#allocation10 + $0x658] sm:$0xff]
    %v700 = vld [vmem:[#allocation10 + $0x660] sm:$0xff]
    %v701 = vld [vmem:[#allocation10 + $0x668] sm:$0xff]
    %v702 = vld [vmem:[#allocation10 + $0x670] sm:$0xf]
    %v703 = vld [vmem:[#allocation10 + $0x674] sm:$0xff]
    %v704 = vld [vmem:[#allocation10 + $0x67c] sm:$0xff]
    %v705 = vld [vmem:[#allocation10 + $0x684] sm:$0xff]
    %v706 = vld [vmem:[#allocation10 + $0x68c] sm:$0xf]
    %v707 = vld [vmem:[#allocation10 + $0x690] sm:$0xff]
    %v708 = vld [vmem:[#allocation10 + $0x698] sm:$0xff]
    %v709 = vld [vmem:[#allocation10 + $0x6a0] sm:$0xff]
    %v710 = vld [vmem:[#allocation10 + $0x6a8] sm:$0xf]
    %v711 = vld [vmem:[#allocation10 + $0x6ac] sm:$0xff]
    %v712 = vld [vmem:[#allocation10 + $0x6b4] sm:$0xff]
    %v713 = vld [vmem:[#allocation10 + $0x6bc] sm:$0xff]
    %v714 = vld [vmem:[#allocation10 + $0x6c4] sm:$0xf]
    %v715 = vld [vmem:[#allocation10 + $0x6c8] sm:$0xff]
    %v716 = vld [vmem:[#allocation10 + $0x6d0] sm:$0xff]
    %v717 = vld [vmem:[#allocation10 + $0x6d8] sm:$0xff]
    %v718 = vld [vmem:[#allocation10 + $0x6e0] sm:$0xf]
    %v719 = vld [vmem:[#allocation10 + $0x6e4] sm:$0xff]
    %v720 = vld [vmem:[#allocation10 + $0x6ec] sm:$0xff]
    %v721 = vld [vmem:[#allocation10 + $0x6f4] sm:$0xff]
    %v722 = vld [vmem:[#allocation10 + $0x6fc] sm:$0xf]
    %v723 = vld [vmem:[%s6] sm:$0xff]
    %v725 = vlaneseq
    %v726 = vshrl.u32 %v725, 7
    %v727 = vsub.s32 0, %v726
    %v728 = vrot.slane %v723, %v727
    %v729 = vlaneseq
    %v730 = vshrl.u32 %v729, 7
    %v731 = vsub.s32 1, %v730
    %v732 = vrot.slane %v723, %v731
    %v733 = vlaneseq
    %v734 = vshrl.u32 %v733, 7
    %v735 = vsub.s32 2, %v734
    %v736 = vrot.slane %v723, %v735
    %v737 = vlaneseq
    %v738 = vshrl.u32 %v737, 7
    %v739 = vsub.s32 3, %v738
    %v740 = vrot.slane %v723, %v739
    %v741 = vlaneseq
    %v742 = vshrl.u32 %v741, 7
    %v743 = vsub.s32 4, %v742
    %v744 = vrot.slane %v723, %v743
    %v745 = vlaneseq
    %v746 = vshrl.u32 %v745, 7
    %v747 = vsub.s32 5, %v746
    %v748 = vrot.slane %v723, %v747
    %v749 = vlaneseq
    %v750 = vshrl.u32 %v749, 7
    %v751 = vsub.s32 6, %v750
    %v752 = vrot.slane %v723, %v751
    %v1016 = vunpack.c.l.b16 %v467
    %v1017 = vunpack.c.h.b16 %v467
    %v1018 = vunpack.c.l.b16 %v468
    %v1019 = vunpack.c.h.b16 %v468
    %v1020 = vunpack.c.l.b16 %v469
    %v1021 = vunpack.c.h.b16 %v469
    %v1022 = vunpack.c.l.b16 %v470
    %v1023 = vunpack.c.l.b16 %v471
    %v1024 = vunpack.c.h.b16 %v471
    %v1025 = vunpack.c.l.b16 %v472
    %v1026 = vunpack.c.h.b16 %v472
    %v1027 = vunpack.c.l.b16 %v473
    %v1028 = vunpack.c.h.b16 %v473
    %v1029 = vunpack.c.l.b16 %v474
    %v1030 = vunpack.c.l.b16 %v475
    %v1031 = vunpack.c.h.b16 %v475
    %v1032 = vunpack.c.l.b16 %v476
    %v1033 = vunpack.c.h.b16 %v476
    %v1034 = vunpack.c.l.b16 %v477
    %v1035 = vunpack.c.h.b16 %v477
    %v1036 = vunpack.c.l.b16 %v478
    %v1037 = vunpack.c.l.b16 %v479
    %v1038 = vunpack.c.h.b16 %v479
    %v1039 = vunpack.c.l.b16 %v480
    %v1040 = vunpack.c.h.b16 %v480
    %v1041 = vunpack.c.l.b16 %v481
    %v1042 = vunpack.c.h.b16 %v481
    %v1043 = vunpack.c.l.b16 %v482
    %v1044 = vunpack.c.l.b16 %v483
    %v1045 = vunpack.c.h.b16 %v483
    %v1046 = vunpack.c.l.b16 %v484
    %v1047 = vunpack.c.h.b16 %v484
    %v1048 = vunpack.c.l.b16 %v485
    %v1049 = vunpack.c.h.b16 %v485
    %v1050 = vunpack.c.l.b16 %v486
    %v1051 = vunpack.c.l.b16 %v487
    %v1052 = vunpack.c.h.b16 %v487
    %v1053 = vunpack.c.l.b16 %v488
    %v1054 = vunpack.c.h.b16 %v488
    %v1055 = vunpack.c.l.b16 %v489
    %v1056 = vunpack.c.h.b16 %v489
    %v1057 = vunpack.c.l.b16 %v490
    %v1058 = vunpack.c.l.b16 %v491
    %v1059 = vunpack.c.h.b16 %v491
    %v1060 = vunpack.c.l.b16 %v492
    %v1061 = vunpack.c.h.b16 %v492
    %v1062 = vunpack.c.l.b16 %v493
    %v1063 = vunpack.c.h.b16 %v493
    %v1064 = vunpack.c.l.b16 %v494
    %v1065 = vunpack.c.l.b16 %v495
    %v1066 = vunpack.c.h.b16 %v495
    %v1067 = vunpack.c.l.b16 %v496
    %v1068 = vunpack.c.h.b16 %v496
    %v1069 = vunpack.c.l.b16 %v497
    %v1070 = vunpack.c.h.b16 %v497
    %v1071 = vunpack.c.l.b16 %v498
    %v1072 = vunpack.c.l.b16 %v499
    %v1073 = vunpack.c.h.b16 %v499
    %v1074 = vunpack.c.l.b16 %v500
    %v1075 = vunpack.c.h.b16 %v500
    %v1076 = vunpack.c.l.b16 %v501
    %v1077 = vunpack.c.h.b16 %v501
    %v1078 = vunpack.c.l.b16 %v502
    %v1079 = vunpack.c.l.b16 %v503
    %v1080 = vunpack.c.h.b16 %v503
    %v1081 = vunpack.c.l.b16 %v504
    %v1082 = vunpack.c.h.b16 %v504
    %v1083 = vunpack.c.l.b16 %v505
    %v1084 = vunpack.c.h.b16 %v505
    %v1085 = vunpack.c.l.b16 %v506
    %v1086 = vunpack.c.l.b16 %v507
    %v1087 = vunpack.c.h.b16 %v507
    %v1088 = vunpack.c.l.b16 %v508
    %v1089 = vunpack.c.h.b16 %v508
    %v1090 = vunpack.c.l.b16 %v509
    %v1091 = vunpack.c.h.b16 %v509
    %v1092 = vunpack.c.l.b16 %v510
    %v1093 = vunpack.c.l.b16 %v511
    %v1094 = vunpack.c.h.b16 %v511
    %v1095 = vunpack.c.l.b16 %v512
    %v1096 = vunpack.c.h.b16 %v512
    %v1097 = vunpack.c.l.b16 %v513
    %v1098 = vunpack.c.h.b16 %v513
    %v1099 = vunpack.c.l.b16 %v514
    %v1100 = vunpack.c.l.b16 %v515
    %v1101 = vunpack.c.h.b16 %v515
    %v1102 = vunpack.c.l.b16 %v516
    %v1103 = vunpack.c.h.b16 %v516
    %v1104 = vunpack.c.l.b16 %v517
    %v1105 = vunpack.c.h.b16 %v517
    %v1106 = vunpack.c.l.b16 %v518
    %v1107 = vunpack.c.l.b16 %v519
    %v1108 = vunpack.c.h.b16 %v519
    %v1109 = vunpack.c.l.b16 %v520
    %v1110 = vunpack.c.h.b16 %v520
    %v1111 = vunpack.c.l.b16 %v521
    %v1112 = vunpack.c.h.b16 %v521
    %v1113 = vunpack.c.l.b16 %v522
    %v1114 = vunpack.c.l.b16 %v523
    %v1115 = vunpack.c.h.b16 %v523
    %v1116 = vunpack.c.l.b16 %v524
    %v1117 = vunpack.c.h.b16 %v524
    %v1118 = vunpack.c.l.b16 %v525
    %v1119 = vunpack.c.h.b16 %v525
    %v1120 = vunpack.c.l.b16 %v526
    %v1121 = vunpack.c.l.b16 %v527
    %v1122 = vunpack.c.h.b16 %v527
    %v1123 = vunpack.c.l.b16 %v528
    %v1124 = vunpack.c.h.b16 %v528
    %v1125 = vunpack.c.l.b16 %v529
    %v1126 = vunpack.c.h.b16 %v529
    %v1127 = vunpack.c.l.b16 %v530
    %v1128 = vunpack.c.l.b16 %v531
    %v1129 = vunpack.c.h.b16 %v531
    %v1130 = vunpack.c.l.b16 %v532
    %v1131 = vunpack.c.h.b16 %v532
    %v1132 = vunpack.c.l.b16 %v533
    %v1133 = vunpack.c.h.b16 %v533
    %v1134 = vunpack.c.l.b16 %v534
    %v1135 = vunpack.c.l.b16 %v535
    %v1136 = vunpack.c.h.b16 %v535
    %v1137 = vunpack.c.l.b16 %v536
    %v1138 = vunpack.c.h.b16 %v536
    %v1139 = vunpack.c.l.b16 %v537
    %v1140 = vunpack.c.h.b16 %v537
    %v1141 = vunpack.c.l.b16 %v538
    %v1142 = vunpack.c.l.b16 %v539
    %v1143 = vunpack.c.h.b16 %v539
    %v1144 = vunpack.c.l.b16 %v540
    %v1145 = vunpack.c.h.b16 %v540
    %v1146 = vunpack.c.l.b16 %v541
    %v1147 = vunpack.c.h.b16 %v541
    %v1148 = vunpack.c.l.b16 %v542
    %v1149 = vunpack.c.l.b16 %v543
    %v1150 = vunpack.c.h.b16 %v543
    %v1151 = vunpack.c.l.b16 %v544
    %v1152 = vunpack.c.h.b16 %v544
    %v1153 = vunpack.c.l.b16 %v545
    %v1154 = vunpack.c.h.b16 %v545
    %v1155 = vunpack.c.l.b16 %v546
    %v1156 = vunpack.c.l.b16 %v547
    %v1157 = vunpack.c.h.b16 %v547
    %v1158 = vunpack.c.l.b16 %v548
    %v1159 = vunpack.c.h.b16 %v548
    %v1160 = vunpack.c.l.b16 %v549
    %v1161 = vunpack.c.h.b16 %v549
    %v1162 = vunpack.c.l.b16 %v550
    %v1163 = vunpack.c.l.b16 %v551
    %v1164 = vunpack.c.h.b16 %v551
    %v1165 = vunpack.c.l.b16 %v552
    %v1166 = vunpack.c.h.b16 %v552
    %v1167 = vunpack.c.l.b16 %v553
    %v1168 = vunpack.c.h.b16 %v553
    %v1169 = vunpack.c.l.b16 %v554
    %v1170 = vunpack.c.l.b16 %v555
    %v1171 = vunpack.c.h.b16 %v555
    %v1172 = vunpack.c.l.b16 %v556
    %v1173 = vunpack.c.h.b16 %v556
    %v1174 = vunpack.c.l.b16 %v557
    %v1175 = vunpack.c.h.b16 %v557
    %v1176 = vunpack.c.l.b16 %v558
    %v1177 = vunpack.c.l.b16 %v559
    %v1178 = vunpack.c.h.b16 %v559
    %v1179 = vunpack.c.l.b16 %v560
    %v1180 = vunpack.c.h.b16 %v560
    %v1181 = vunpack.c.l.b16 %v561
    %v1182 = vunpack.c.h.b16 %v561
    %v1183 = vunpack.c.l.b16 %v562
    %v1184 = vunpack.c.l.b16 %v563
    %v1185 = vunpack.c.h.b16 %v563
    %v1186 = vunpack.c.l.b16 %v564
    %v1187 = vunpack.c.h.b16 %v564
    %v1188 = vunpack.c.l.b16 %v565
    %v1189 = vunpack.c.h.b16 %v565
    %v1190 = vunpack.c.l.b16 %v566
    %v1191 = vunpack.c.l.b16 %v567
    %v1192 = vunpack.c.h.b16 %v567
    %v1193 = vunpack.c.l.b16 %v568
    %v1194 = vunpack.c.h.b16 %v568
    %v1195 = vunpack.c.l.b16 %v569
    %v1196 = vunpack.c.h.b16 %v569
    %v1197 = vunpack.c.l.b16 %v570
    %v1198 = vunpack.c.l.b16 %v571
    %v1199 = vunpack.c.h.b16 %v571
    %v1200 = vunpack.c.l.b16 %v572
    %v1201 = vunpack.c.h.b16 %v572
    %v1202 = vunpack.c.l.b16 %v573
    %v1203 = vunpack.c.h.b16 %v573
    %v1204 = vunpack.c.l.b16 %v574
    %v1205 = vunpack.c.l.b16 %v575
    %v1206 = vunpack.c.h.b16 %v575
    %v1207 = vunpack.c.l.b16 %v576
    %v1208 = vunpack.c.h.b16 %v576
    %v1209 = vunpack.c.l.b16 %v577
    %v1210 = vunpack.c.h.b16 %v577
    %v1211 = vunpack.c.l.b16 %v578
    %v1212 = vunpack.c.l.b16 %v579
    %v1213 = vunpack.c.h.b16 %v579
    %v1214 = vunpack.c.l.b16 %v580
    %v1215 = vunpack.c.h.b16 %v580
    %v1216 = vunpack.c.l.b16 %v581
    %v1217 = vunpack.c.h.b16 %v581
    %v1218 = vunpack.c.l.b16 %v582
    %v1219 = vunpack.c.l.b16 %v583
    %v1220 = vunpack.c.h.b16 %v583
    %v1221 = vunpack.c.l.b16 %v584
    %v1222 = vunpack.c.h.b16 %v584
    %v1223 = vunpack.c.l.b16 %v585
    %v1224 = vunpack.c.h.b16 %v585
    %v1225 = vunpack.c.l.b16 %v586
    %v1226 = vunpack.c.l.b16 %v587
    %v1227 = vunpack.c.h.b16 %v587
    %v1228 = vunpack.c.l.b16 %v588
    %v1229 = vunpack.c.h.b16 %v588
    %v1230 = vunpack.c.l.b16 %v589
    %v1231 = vunpack.c.h.b16 %v589
    %v1232 = vunpack.c.l.b16 %v590
    %v1233 = vunpack.c.l.b16 %v591
    %v1234 = vunpack.c.h.b16 %v591
    %v1235 = vunpack.c.l.b16 %v592
    %v1236 = vunpack.c.h.b16 %v592
    %v1237 = vunpack.c.l.b16 %v593
    %v1238 = vunpack.c.h.b16 %v593
    %v1239 = vunpack.c.l.b16 %v594
    %v1240 = vunpack.c.l.b16 %v595
    %v1241 = vunpack.c.h.b16 %v595
    %v1242 = vunpack.c.l.b16 %v596
    %v1243 = vunpack.c.h.b16 %v596
    %v1244 = vunpack.c.l.b16 %v597
    %v1245 = vunpack.c.h.b16 %v597
    %v1246 = vunpack.c.l.b16 %v598
    %v1247 = vunpack.c.l.b16 %v599
    %v1248 = vunpack.c.h.b16 %v599
    %v1249 = vunpack.c.l.b16 %v600
    %v1250 = vunpack.c.h.b16 %v600
    %v1251 = vunpack.c.l.b16 %v601
    %v1252 = vunpack.c.h.b16 %v601
    %v1253 = vunpack.c.l.b16 %v602
    %v1254 = vunpack.c.l.b16 %v603
    %v1255 = vunpack.c.h.b16 %v603
    %v1256 = vunpack.c.l.b16 %v604
    %v1257 = vunpack.c.h.b16 %v604
    %v1258 = vunpack.c.l.b16 %v605
    %v1259 = vunpack.c.h.b16 %v605
    %v1260 = vunpack.c.l.b16 %v606
    %v1261 = vunpack.c.l.b16 %v607
    %v1262 = vunpack.c.h.b16 %v607
    %v1263 = vunpack.c.l.b16 %v608
    %v1264 = vunpack.c.h.b16 %v608
    %v1265 = vunpack.c.l.b16 %v609
    %v1266 = vunpack.c.h.b16 %v609
    %v1267 = vunpack.c.l.b16 %v610
    %v1268 = vunpack.c.l.b16 %v611
    %v1269 = vunpack.c.h.b16 %v611
    %v1270 = vunpack.c.l.b16 %v612
    %v1271 = vunpack.c.h.b16 %v612
    %v1272 = vunpack.c.l.b16 %v613
    %v1273 = vunpack.c.h.b16 %v613
    %v1274 = vunpack.c.l.b16 %v614
    %v1275 = vunpack.c.l.b16 %v615
    %v1276 = vunpack.c.h.b16 %v615
    %v1277 = vunpack.c.l.b16 %v616
    %v1278 = vunpack.c.h.b16 %v616
    %v1279 = vunpack.c.l.b16 %v617
    %v1280 = vunpack.c.h.b16 %v617
    %v1281 = vunpack.c.l.b16 %v618
    %v1282 = vunpack.c.l.b16 %v619
    %v1283 = vunpack.c.h.b16 %v619
    %v1284 = vunpack.c.l.b16 %v620
    %v1285 = vunpack.c.h.b16 %v620
    %v1286 = vunpack.c.l.b16 %v621
    %v1287 = vunpack.c.h.b16 %v621
    %v1288 = vunpack.c.l.b16 %v622
    %v1289 = vunpack.c.l.b16 %v623
    %v1290 = vunpack.c.h.b16 %v623
    %v1291 = vunpack.c.l.b16 %v624
    %v1292 = vunpack.c.h.b16 %v624
    %v1293 = vunpack.c.l.b16 %v625
    %v1294 = vunpack.c.h.b16 %v625
    %v1295 = vunpack.c.l.b16 %v626
    %v1296 = vunpack.c.l.b16 %v627
    %v1297 = vunpack.c.h.b16 %v627
    %v1298 = vunpack.c.l.b16 %v628
    %v1299 = vunpack.c.h.b16 %v628
    %v1300 = vunpack.c.l.b16 %v629
    %v1301 = vunpack.c.h.b16 %v629
    %v1302 = vunpack.c.l.b16 %v630
    %v1303 = vunpack.c.l.b16 %v631
    %v1304 = vunpack.c.h.b16 %v631
    %v1305 = vunpack.c.l.b16 %v632
    %v1306 = vunpack.c.h.b16 %v632
    %v1307 = vunpack.c.l.b16 %v633
    %v1308 = vunpack.c.h.b16 %v633
    %v1309 = vunpack.c.l.b16 %v634
    %v1310 = vunpack.c.l.b16 %v635
    %v1311 = vunpack.c.h.b16 %v635
    %v1312 = vunpack.c.l.b16 %v636
    %v1313 = vunpack.c.h.b16 %v636
    %v1314 = vunpack.c.l.b16 %v637
    %v1315 = vunpack.c.h.b16 %v637
    %v1316 = vunpack.c.l.b16 %v638
    %v1317 = vunpack.c.l.b16 %v639
    %v1318 = vunpack.c.h.b16 %v639
    %v1319 = vunpack.c.l.b16 %v640
    %v1320 = vunpack.c.h.b16 %v640
    %v1321 = vunpack.c.l.b16 %v641
    %v1322 = vunpack.c.h.b16 %v641
    %v1323 = vunpack.c.l.b16 %v642
    %v1324 = vunpack.c.l.b16 %v643
    %v1325 = vunpack.c.h.b16 %v643
    %v1326 = vunpack.c.l.b16 %v644
    %v1327 = vunpack.c.h.b16 %v644
    %v1328 = vunpack.c.l.b16 %v645
    %v1329 = vunpack.c.h.b16 %v645
    %v1330 = vunpack.c.l.b16 %v646
    %v1331 = vunpack.c.l.b16 %v647
    %v1332 = vunpack.c.h.b16 %v647
    %v1333 = vunpack.c.l.b16 %v648
    %v1334 = vunpack.c.h.b16 %v648
    %v1335 = vunpack.c.l.b16 %v649
    %v1336 = vunpack.c.h.b16 %v649
    %v1337 = vunpack.c.l.b16 %v650
    %v1338 = vunpack.c.l.b16 %v651
    %v1339 = vunpack.c.h.b16 %v651
    %v1340 = vunpack.c.l.b16 %v652
    %v1341 = vunpack.c.h.b16 %v652
    %v1342 = vunpack.c.l.b16 %v653
    %v1343 = vunpack.c.h.b16 %v653
    %v1344 = vunpack.c.l.b16 %v654
    %v1345 = vunpack.c.l.b16 %v655
    %v1346 = vunpack.c.h.b16 %v655
    %v1347 = vunpack.c.l.b16 %v656
    %v1348 = vunpack.c.h.b16 %v656
    %v1349 = vunpack.c.l.b16 %v657
    %v1350 = vunpack.c.h.b16 %v657
    %v1351 = vunpack.c.l.b16 %v658
    %v1352 = vunpack.c.l.b16 %v659
    %v1353 = vunpack.c.h.b16 %v659
    %v1354 = vunpack.c.l.b16 %v660
    %v1355 = vunpack.c.h.b16 %v660
    %v1356 = vunpack.c.l.b16 %v661
    %v1357 = vunpack.c.h.b16 %v661
    %v1358 = vunpack.c.l.b16 %v662
    %v1359 = vunpack.c.l.b16 %v663
    %v1360 = vunpack.c.h.b16 %v663
    %v1361 = vunpack.c.l.b16 %v664
    %v1362 = vunpack.c.h.b16 %v664
    %v1363 = vunpack.c.l.b16 %v665
    %v1364 = vunpack.c.h.b16 %v665
    %v1365 = vunpack.c.l.b16 %v666
    %v1366 = vunpack.c.l.b16 %v667
    %v1367 = vunpack.c.h.b16 %v667
    %v1368 = vunpack.c.l.b16 %v668
    %v1369 = vunpack.c.h.b16 %v668
    %v1370 = vunpack.c.l.b16 %v669
    %v1371 = vunpack.c.h.b16 %v669
    %v1372 = vunpack.c.l.b16 %v670
    %v1373 = vunpack.c.l.b16 %v671
    %v1374 = vunpack.c.h.b16 %v671
    %v1375 = vunpack.c.l.b16 %v672
    %v1376 = vunpack.c.h.b16 %v672
    %v1377 = vunpack.c.l.b16 %v673
    %v1378 = vunpack.c.h.b16 %v673
    %v1379 = vunpack.c.l.b16 %v674
    %v1380 = vunpack.c.l.b16 %v675
    %v1381 = vunpack.c.h.b16 %v675
    %v1382 = vunpack.c.l.b16 %v676
    %v1383 = vunpack.c.h.b16 %v676
    %v1384 = vunpack.c.l.b16 %v677
    %v1385 = vunpack.c.h.b16 %v677
    %v1386 = vunpack.c.l.b16 %v678
    %v1387 = vunpack.c.l.b16 %v679
    %v1388 = vunpack.c.h.b16 %v679
    %v1389 = vunpack.c.l.b16 %v680
    %v1390 = vunpack.c.h.b16 %v680
    %v1391 = vunpack.c.l.b16 %v681
    %v1392 = vunpack.c.h.b16 %v681
    %v1393 = vunpack.c.l.b16 %v682
    %v1394 = vunpack.c.l.b16 %v683
    %v1395 = vunpack.c.h.b16 %v683
    %v1396 = vunpack.c.l.b16 %v684
    %v1397 = vunpack.c.h.b16 %v684
    %v1398 = vunpack.c.l.b16 %v685
    %v1399 = vunpack.c.h.b16 %v685
    %v1400 = vunpack.c.l.b16 %v686
    %v1401 = vunpack.c.l.b16 %v687
    %v1402 = vunpack.c.h.b16 %v687
    %v1403 = vunpack.c.l.b16 %v688
    %v1404 = vunpack.c.h.b16 %v688
    %v1405 = vunpack.c.l.b16 %v689
    %v1406 = vunpack.c.h.b16 %v689
    %v1407 = vunpack.c.l.b16 %v690
    %v1408 = vunpack.c.l.b16 %v691
    %v1409 = vunpack.c.h.b16 %v691
    %v1410 = vunpack.c.l.b16 %v692
    %v1411 = vunpack.c.h.b16 %v692
    %v1412 = vunpack.c.l.b16 %v693
    %v1413 = vunpack.c.h.b16 %v693
    %v1414 = vunpack.c.l.b16 %v694
    %v1415 = vunpack.c.l.b16 %v695
    %v1416 = vunpack.c.h.b16 %v695
    %v1417 = vunpack.c.l.b16 %v696
    %v1418 = vunpack.c.h.b16 %v696
    %v1419 = vunpack.c.l.b16 %v697
    %v1420 = vunpack.c.h.b16 %v697
    %v1421 = vunpack.c.l.b16 %v698
    %v1422 = vunpack.c.l.b16 %v699
    %v1423 = vunpack.c.h.b16 %v699
    %v1424 = vunpack.c.l.b16 %v700
    %v1425 = vunpack.c.h.b16 %v700
    %v1426 = vunpack.c.l.b16 %v701
    %v1427 = vunpack.c.h.b16 %v701
    %v1428 = vunpack.c.l.b16 %v702
    %v1429 = vunpack.c.l.b16 %v703
    %v1430 = vunpack.c.h.b16 %v703
    %v1431 = vunpack.c.l.b16 %v704
    %v1432 = vunpack.c.h.b16 %v704
    %v1433 = vunpack.c.l.b16 %v705
    %v1434 = vunpack.c.h.b16 %v705
    %v1435 = vunpack.c.l.b16 %v706
    %v1436 = vunpack.c.l.b16 %v707
    %v1437 = vunpack.c.h.b16 %v707
    %v1438 = vunpack.c.l.b16 %v708
    %v1439 = vunpack.c.h.b16 %v708
    %v1440 = vunpack.c.l.b16 %v709
    %v1441 = vunpack.c.h.b16 %v709
    %v1442 = vunpack.c.l.b16 %v710
    %v1443 = vunpack.c.l.b16 %v711
    %v1444 = vunpack.c.h.b16 %v711
    %v1445 = vunpack.c.l.b16 %v712
    %v1446 = vunpack.c.h.b16 %v712
    %v1447 = vunpack.c.l.b16 %v713
    %v1448 = vunpack.c.h.b16 %v713
    %v1449 = vunpack.c.l.b16 %v714
    %v1450 = vunpack.c.l.b16 %v715
    %v1451 = vunpack.c.h.b16 %v715
    %v1452 = vunpack.c.l.b16 %v716
    %v1453 = vunpack.c.h.b16 %v716
    %v1454 = vunpack.c.l.b16 %v717
    %v1455 = vunpack.c.h.b16 %v717
    %v1456 = vunpack.c.l.b16 %v718
    %v1457 = vunpack.c.l.b16 %v719
    %v1458 = vunpack.c.h.b16 %v719
    %v1459 = vunpack.c.l.b16 %v720
    %v1460 = vunpack.c.h.b16 %v720
    %v1461 = vunpack.c.l.b16 %v721
    %v1462 = vunpack.c.h.b16 %v721
    %v1463 = vunpack.c.l.b16 %v722
    %v1464 = vpack.c.b16 %v1023, %v1016
    %v1465 = vpack.c.b16 %v1024, %v1017
    %v1466 = vpack.c.b16 %v1025, %v1018
    %v1467 = vpack.c.b16 %v1026, %v1019
    %v1468 = vpack.c.b16 %v1027, %v1020
    %v1469 = vpack.c.b16 %v1028, %v1021
    %v1470 = vpack.c.b16 %v1029, %v1022
    %v1471 = vpack.c.b16 %v1037, %v1030
    %v1472 = vpack.c.b16 %v1038, %v1031
    %v1473 = vpack.c.b16 %v1039, %v1032
    %v1474 = vpack.c.b16 %v1040, %v1033
    %v1475 = vpack.c.b16 %v1041, %v1034
    %v1476 = vpack.c.b16 %v1042, %v1035
    %v1477 = vpack.c.b16 %v1043, %v1036
    %v1478 = vpack.c.b16 %v1051, %v1044
    %v1479 = vpack.c.b16 %v1052, %v1045
    %v1480 = vpack.c.b16 %v1053, %v1046
    %v1481 = vpack.c.b16 %v1054, %v1047
    %v1482 = vpack.c.b16 %v1055, %v1048
    %v1483 = vpack.c.b16 %v1056, %v1049
    %v1484 = vpack.c.b16 %v1057, %v1050
    %v1485 = vpack.c.b16 %v1065, %v1058
    %v1486 = vpack.c.b16 %v1066, %v1059
    %v1487 = vpack.c.b16 %v1067, %v1060
    %v1488 = vpack.c.b16 %v1068, %v1061
    %v1489 = vpack.c.b16 %v1069, %v1062
    %v1490 = vpack.c.b16 %v1070, %v1063
    %v1491 = vpack.c.b16 %v1071, %v1064
    %v1492 = vpack.c.b16 %v1079, %v1072
    %v1493 = vpack.c.b16 %v1080, %v1073
    %v1494 = vpack.c.b16 %v1081, %v1074
    %v1495 = vpack.c.b16 %v1082, %v1075
    %v1496 = vpack.c.b16 %v1083, %v1076
    %v1497 = vpack.c.b16 %v1084, %v1077
    %v1498 = vpack.c.b16 %v1085, %v1078
    %v1499 = vpack.c.b16 %v1093, %v1086
    %v1500 = vpack.c.b16 %v1094, %v1087
    %v1501 = vpack.c.b16 %v1095, %v1088
    %v1502 = vpack.c.b16 %v1096, %v1089
    %v1503 = vpack.c.b16 %v1097, %v1090
    %v1504 = vpack.c.b16 %v1098, %v1091
    %v1505 = vpack.c.b16 %v1099, %v1092
    %v1506 = vpack.c.b16 %v1107, %v1100
    %v1507 = vpack.c.b16 %v1108, %v1101
    %v1508 = vpack.c.b16 %v1109, %v1102
    %v1509 = vpack.c.b16 %v1110, %v1103
    %v1510 = vpack.c.b16 %v1111, %v1104
    %v1511 = vpack.c.b16 %v1112, %v1105
    %v1512 = vpack.c.b16 %v1113, %v1106
    %v1513 = vpack.c.b16 %v1121, %v1114
    %v1514 = vpack.c.b16 %v1122, %v1115
    %v1515 = vpack.c.b16 %v1123, %v1116
    %v1516 = vpack.c.b16 %v1124, %v1117
    %v1517 = vpack.c.b16 %v1125, %v1118
    %v1518 = vpack.c.b16 %v1126, %v1119
    %v1519 = vpack.c.b16 %v1127, %v1120
    %v1520 = vpack.c.b16 %v1135, %v1128
    %v1521 = vpack.c.b16 %v1136, %v1129
    %v1522 = vpack.c.b16 %v1137, %v1130
    %v1523 = vpack.c.b16 %v1138, %v1131
    %v1524 = vpack.c.b16 %v1139, %v1132
    %v1525 = vpack.c.b16 %v1140, %v1133
    %v1526 = vpack.c.b16 %v1141, %v1134
    %v1527 = vpack.c.b16 %v1149, %v1142
    %v1528 = vpack.c.b16 %v1150, %v1143
    %v1529 = vpack.c.b16 %v1151, %v1144
    %v1530 = vpack.c.b16 %v1152, %v1145
    %v1531 = vpack.c.b16 %v1153, %v1146
    %v1532 = vpack.c.b16 %v1154, %v1147
    %v1533 = vpack.c.b16 %v1155, %v1148
    %v1534 = vpack.c.b16 %v1163, %v1156
    %v1535 = vpack.c.b16 %v1164, %v1157
    %v1536 = vpack.c.b16 %v1165, %v1158
    %v1537 = vpack.c.b16 %v1166, %v1159
    %v1538 = vpack.c.b16 %v1167, %v1160
    %v1539 = vpack.c.b16 %v1168, %v1161
    %v1540 = vpack.c.b16 %v1169, %v1162
    %v1541 = vpack.c.b16 %v1177, %v1170
    %v1542 = vpack.c.b16 %v1178, %v1171
    %v1543 = vpack.c.b16 %v1179, %v1172
    %v1544 = vpack.c.b16 %v1180, %v1173
    %v1545 = vpack.c.b16 %v1181, %v1174
    %v1546 = vpack.c.b16 %v1182, %v1175
    %v1547 = vpack.c.b16 %v1183, %v1176
    %v1548 = vpack.c.b16 %v1191, %v1184
    %v1549 = vpack.c.b16 %v1192, %v1185
    %v1550 = vpack.c.b16 %v1193, %v1186
    %v1551 = vpack.c.b16 %v1194, %v1187
    %v1552 = vpack.c.b16 %v1195, %v1188
    %v1553 = vpack.c.b16 %v1196, %v1189
    %v1554 = vpack.c.b16 %v1197, %v1190
    %v1555 = vpack.c.b16 %v1205, %v1198
    %v1556 = vpack.c.b16 %v1206, %v1199
    %v1557 = vpack.c.b16 %v1207, %v1200
    %v1558 = vpack.c.b16 %v1208, %v1201
    %v1559 = vpack.c.b16 %v1209, %v1202
    %v1560 = vpack.c.b16 %v1210, %v1203
    %v1561 = vpack.c.b16 %v1211, %v1204
    %v1562 = vpack.c.b16 %v1219, %v1212
    %v1563 = vpack.c.b16 %v1220, %v1213
    %v1564 = vpack.c.b16 %v1221, %v1214
    %v1565 = vpack.c.b16 %v1222, %v1215
    %v1566 = vpack.c.b16 %v1223, %v1216
    %v1567 = vpack.c.b16 %v1224, %v1217
    %v1568 = vpack.c.b16 %v1225, %v1218
    %v1569 = vpack.c.b16 %v1233, %v1226
    %v1570 = vpack.c.b16 %v1234, %v1227
    %v1571 = vpack.c.b16 %v1235, %v1228
    %v1572 = vpack.c.b16 %v1236, %v1229
    %v1573 = vpack.c.b16 %v1237, %v1230
    %v1574 = vpack.c.b16 %v1238, %v1231
    %v1575 = vpack.c.b16 %v1239, %v1232
    %v1576 = vpack.c.b16 %v1247, %v1240
    %v1577 = vpack.c.b16 %v1248, %v1241
    %v1578 = vpack.c.b16 %v1249, %v1242
    %v1579 = vpack.c.b16 %v1250, %v1243
    %v1580 = vpack.c.b16 %v1251, %v1244
    %v1581 = vpack.c.b16 %v1252, %v1245
    %v1582 = vpack.c.b16 %v1253, %v1246
    %v1583 = vpack.c.b16 %v1261, %v1254
    %v1584 = vpack.c.b16 %v1262, %v1255
    %v1585 = vpack.c.b16 %v1263, %v1256
    %v1586 = vpack.c.b16 %v1264, %v1257
    %v1587 = vpack.c.b16 %v1265, %v1258
    %v1588 = vpack.c.b16 %v1266, %v1259
    %v1589 = vpack.c.b16 %v1267, %v1260
    %v1590 = vpack.c.b16 %v1275, %v1268
    %v1591 = vpack.c.b16 %v1276, %v1269
    %v1592 = vpack.c.b16 %v1277, %v1270
    %v1593 = vpack.c.b16 %v1278, %v1271
    %v1594 = vpack.c.b16 %v1279, %v1272
    %v1595 = vpack.c.b16 %v1280, %v1273
    %v1596 = vpack.c.b16 %v1281, %v1274
    %v1597 = vpack.c.b16 %v1289, %v1282
    %v1598 = vpack.c.b16 %v1290, %v1283
    %v1599 = vpack.c.b16 %v1291, %v1284
    %v1600 = vpack.c.b16 %v1292, %v1285
    %v1601 = vpack.c.b16 %v1293, %v1286
    %v1602 = vpack.c.b16 %v1294, %v1287
    %v1603 = vpack.c.b16 %v1295, %v1288
    %v1604 = vpack.c.b16 %v1303, %v1296
    %v1605 = vpack.c.b16 %v1304, %v1297
    %v1606 = vpack.c.b16 %v1305, %v1298
    %v1607 = vpack.c.b16 %v1306, %v1299
    %v1608 = vpack.c.b16 %v1307, %v1300
    %v1609 = vpack.c.b16 %v1308, %v1301
    %v1610 = vpack.c.b16 %v1309, %v1302
    %v1611 = vpack.c.b16 %v1317, %v1310
    %v1612 = vpack.c.b16 %v1318, %v1311
    %v1613 = vpack.c.b16 %v1319, %v1312
    %v1614 = vpack.c.b16 %v1320, %v1313
    %v1615 = vpack.c.b16 %v1321, %v1314
    %v1616 = vpack.c.b16 %v1322, %v1315
    %v1617 = vpack.c.b16 %v1323, %v1316
    %v1618 = vpack.c.b16 %v1331, %v1324
    %v1619 = vpack.c.b16 %v1332, %v1325
    %v1620 = vpack.c.b16 %v1333, %v1326
    %v1621 = vpack.c.b16 %v1334, %v1327
    %v1622 = vpack.c.b16 %v1335, %v1328
    %v1623 = vpack.c.b16 %v1336, %v1329
    %v1624 = vpack.c.b16 %v1337, %v1330
    %v1625 = vpack.c.b16 %v1345, %v1338
    %v1626 = vpack.c.b16 %v1346, %v1339
    %v1627 = vpack.c.b16 %v1347, %v1340
    %v1628 = vpack.c.b16 %v1348, %v1341
    %v1629 = vpack.c.b16 %v1349, %v1342
    %v1630 = vpack.c.b16 %v1350, %v1343
    %v1631 = vpack.c.b16 %v1351, %v1344
    %v1632 = vpack.c.b16 %v1359, %v1352
    %v1633 = vpack.c.b16 %v1360, %v1353
    %v1634 = vpack.c.b16 %v1361, %v1354
    %v1635 = vpack.c.b16 %v1362, %v1355
    %v1636 = vpack.c.b16 %v1363, %v1356
    %v1637 = vpack.c.b16 %v1364, %v1357
    %v1638 = vpack.c.b16 %v1365, %v1358
    %v1639 = vpack.c.b16 %v1373, %v1366
    %v1640 = vpack.c.b16 %v1374, %v1367
    %v1641 = vpack.c.b16 %v1375, %v1368
    %v1642 = vpack.c.b16 %v1376, %v1369
    %v1643 = vpack.c.b16 %v1377, %v1370
    %v1644 = vpack.c.b16 %v1378, %v1371
    %v1645 = vpack.c.b16 %v1379, %v1372
    %v1646 = vpack.c.b16 %v1387, %v1380
    %v1647 = vpack.c.b16 %v1388, %v1381
    %v1648 = vpack.c.b16 %v1389, %v1382
    %v1649 = vpack.c.b16 %v1390, %v1383
    %v1650 = vpack.c.b16 %v1391, %v1384
    %v1651 = vpack.c.b16 %v1392, %v1385
    %v1652 = vpack.c.b16 %v1393, %v1386
    %v1653 = vpack.c.b16 %v1401, %v1394
    %v1654 = vpack.c.b16 %v1402, %v1395
    %v1655 = vpack.c.b16 %v1403, %v1396
    %v1656 = vpack.c.b16 %v1404, %v1397
    %v1657 = vpack.c.b16 %v1405, %v1398
    %v1658 = vpack.c.b16 %v1406, %v1399
    %v1659 = vpack.c.b16 %v1407, %v1400
    %v1660 = vpack.c.b16 %v1415, %v1408
    %v1661 = vpack.c.b16 %v1416, %v1409
    %v1662 = vpack.c.b16 %v1417, %v1410
    %v1663 = vpack.c.b16 %v1418, %v1411
    %v1664 = vpack.c.b16 %v1419, %v1412
    %v1665 = vpack.c.b16 %v1420, %v1413
    %v1666 = vpack.c.b16 %v1421, %v1414
    %v1667 = vpack.c.b16 %v1429, %v1422
    %v1668 = vpack.c.b16 %v1430, %v1423
    %v1669 = vpack.c.b16 %v1431, %v1424
    %v1670 = vpack.c.b16 %v1432, %v1425
    %v1671 = vpack.c.b16 %v1433, %v1426
    %v1672 = vpack.c.b16 %v1434, %v1427
    %v1673 = vpack.c.b16 %v1435, %v1428
    %v1674 = vpack.c.b16 %v1443, %v1436
    %v1675 = vpack.c.b16 %v1444, %v1437
    %v1676 = vpack.c.b16 %v1445, %v1438
    %v1677 = vpack.c.b16 %v1446, %v1439
    %v1678 = vpack.c.b16 %v1447, %v1440
    %v1679 = vpack.c.b16 %v1448, %v1441
    %v1680 = vpack.c.b16 %v1449, %v1442
    %v1681 = vpack.c.b16 %v1457, %v1450
    %v1682 = vpack.c.b16 %v1458, %v1451
    %v1683 = vpack.c.b16 %v1459, %v1452
    %v1684 = vpack.c.b16 %v1460, %v1453
    %v1685 = vpack.c.b16 %v1461, %v1454
    %v1686 = vpack.c.b16 %v1462, %v1455
    %v1687 = vpack.c.b16 %v1463, %v1456
    %1912 = vmatprep.subr.bf16.mxu0 %v1514
    %1913 = vmatpush1.bf16.msra.mxu0 %v1513
    %1914 = vmatprep.subr.bf16.mxu0 %v1507
    %1915 = vmatpush1.bf16.msra.mxu0 %v1506
    %1916 = vmatprep.subr.bf16.mxu0 %v1500
    %1917 = vmatpush1.bf16.msra.mxu0 %v1499
    %1918 = vmatprep.subr.bf16.mxu0 %v1493
    %1919 = vmatpush1.bf16.msra.mxu0 %v1492
    %1920 = vmatprep.subr.bf16.mxu0 %v1486
    %1921 = vmatpush1.bf16.msra.mxu0 %v1485
    %1922 = vmatprep.subr.bf16.mxu0 %v1479
    %1923 = vmatpush1.bf16.msra.mxu0 %v1478
    %1924 = vmatprep.subr.bf16.mxu0 %v1472
    %1925 = vmatpush1.bf16.msra.mxu0 %v1471
    %1926 = vmatprep.subr.bf16.mxu0 %v1465
    %1927 = vmatpush1.bf16.msra.mxu0 %v1464
    %1928 = vmatprep.subr.bf16.mxu0 %v1570
    %1929 = vmatpush2.bf16.msra.mxu0 %v1569
    %1930 = vmatprep.subr.bf16.mxu0 %v1563
    %1931 = vmatpush2.bf16.msra.mxu0 %v1562
    %1932 = vmatprep.subr.bf16.mxu0 %v1556
    %1933 = vmatpush2.bf16.msra.mxu0 %v1555
    %1934 = vmatprep.subr.bf16.mxu0 %v1549
    %1935 = vmatpush2.bf16.msra.mxu0 %v1548
    %1936 = vmatprep.subr.bf16.mxu0 %v1542
    %1937 = vmatpush2.bf16.msra.mxu0 %v1541
    %1938 = vmatprep.subr.bf16.mxu0 %v1535
    %1939 = vmatpush2.bf16.msra.mxu0 %v1534
    %1940 = vmatprep.subr.bf16.mxu0 %v1528
    %1941 = vmatpush2.bf16.msra.mxu0 %v1527
    %1942 = vmatprep.subr.bf16.mxu0 %v1521
    %1943 = vmatpush2.bf16.msra.mxu0 %v1520
    %1944 = vmatprep.mubr.bf16.mxu0 %v464
    %1945 = vmatmul.mubr.bf16.gmra.mxu0 %v463
    %v1946 = vpop.f32.mrf.mxu0
    %v1947 = vadd.f32 %v728, %v1946
    %v1948 = vpop.f32.mrf.mxu0
    %v1949 = vadd.f32 %v732, %v1948
    %v1950 = vpop.f32.mrf.mxu0
    %v1951 = vpop.f32.mrf.mxu0
    %1952 = vdwg.mxu0
    %1953 = vmatprep.subr.bf16.mxu0 %v1626
    %1954 = vmatpush1.bf16.msra.mxu0 %v1625
    %1955 = vmatprep.subr.bf16.mxu0 %v1619
    %1956 = vmatpush1.bf16.msra.mxu0 %v1618
    %1957 = vmatprep.subr.bf16.mxu0 %v1612
    %1958 = vmatpush1.bf16.msra.mxu0 %v1611
    %1959 = vmatprep.subr.bf16.mxu0 %v1605
    %1960 = vmatpush1.bf16.msra.mxu0 %v1604
    %1961 = vmatprep.subr.bf16.mxu0 %v1598
    %1962 = vmatpush1.bf16.msra.mxu0 %v1597
    %1963 = vmatprep.subr.bf16.mxu0 %v1591
    %1964 = vmatpush1.bf16.msra.mxu0 %v1590
    %1965 = vmatprep.subr.bf16.mxu0 %v1584
    %1966 = vmatpush1.bf16.msra.mxu0 %v1583
    %1967 = vmatprep.subr.bf16.mxu0 %v1577
    %1968 = vmatpush1.bf16.msra.mxu0 %v1576
    %1969 = vmatprep.subr.bf16.mxu0 %v1682
    %1970 = vmatpush2.bf16.msra.mxu0 %v1681
    %1971 = vmatprep.subr.bf16.mxu0 %v1675
    %1972 = vmatpush2.bf16.msra.mxu0 %v1674
    %1973 = vmatprep.subr.bf16.mxu0 %v1668
    %1974 = vmatpush2.bf16.msra.mxu0 %v1667
    %1975 = vmatprep.subr.bf16.mxu0 %v1661
    %1976 = vmatpush2.bf16.msra.mxu0 %v1660
    %1977 = vmatprep.subr.bf16.mxu0 %v1654
    %1978 = vmatpush2.bf16.msra.mxu0 %v1653
    %1979 = vmatprep.subr.bf16.mxu0 %v1647
    %1980 = vmatpush2.bf16.msra.mxu0 %v1646
    %1981 = vmatprep.subr.bf16.mxu0 %v1640
    %1982 = vmatpush2.bf16.msra.mxu0 %v1639
    %1983 = vmatprep.subr.bf16.mxu0 %v1633
    %1984 = vmatpush2.bf16.msra.mxu0 %v1632
    %1985 = vmatprep.mubr.bf16.mxu0 %v466
    %1986 = vmatmul.mubr.bf16.gmra.mxu0 %v465
    %v1987 = vpop.f32.mrf.mxu0
    %v1988 = vadd.f32 %v1947, %v1987
    %v1989 = vpop.f32.mrf.mxu0
    %v1990 = vadd.f32 %v1949, %v1989
    %v1991 = vpop.f32.mrf.mxu0
    %v1992 = vpop.f32.mrf.mxu0
    %1993 = vdwg.mxu0
    %1994 = vmatprep.subr.bf16.mxu0 %v1516
    %1995 = vmatpush1.bf16.msra.mxu0 %v1515
    %1996 = vmatprep.subr.bf16.mxu0 %v1509
    %1997 = vmatpush1.bf16.msra.mxu0 %v1508
    %1998 = vmatprep.subr.bf16.mxu0 %v1502
    %1999 = vmatpush1.bf16.msra.mxu0 %v1501
    %2000 = vmatprep.subr.bf16.mxu0 %v1495
    %2001 = vmatpush1.bf16.msra.mxu0 %v1494
    %2002 = vmatprep.subr.bf16.mxu0 %v1488
    %2003 = vmatpush1.bf16.msra.mxu0 %v1487
    %2004 = vmatprep.subr.bf16.mxu0 %v1481
    %2005 = vmatpush1.bf16.msra.mxu0 %v1480
    %2006 = vmatprep.subr.bf16.mxu0 %v1474
    %2007 = vmatpush1.bf16.msra.mxu0 %v1473
    %2008 = vmatprep.subr.bf16.mxu0 %v1467
    %2009 = vmatpush1.bf16.msra.mxu0 %v1466
    %2010 = vmatprep.subr.bf16.mxu0 %v1572
    %2011 = vmatpush2.bf16.msra.mxu0 %v1571
    %2012 = vmatprep.subr.bf16.mxu0 %v1565
    %2013 = vmatpush2.bf16.msra.mxu0 %v1564
    %2014 = vmatprep.subr.bf16.mxu0 %v1558
    %2015 = vmatpush2.bf16.msra.mxu0 %v1557
    %2016 = vmatprep.subr.bf16.mxu0 %v1551
    %2017 = vmatpush2.bf16.msra.mxu0 %v1550
    %2018 = vmatprep.subr.bf16.mxu0 %v1544
    %2019 = vmatpush2.bf16.msra.mxu0 %v1543
    %2020 = vmatprep.subr.bf16.mxu0 %v1537
    %2021 = vmatpush2.bf16.msra.mxu0 %v1536
    %2022 = vmatprep.subr.bf16.mxu0 %v1530
    %2023 = vmatpush2.bf16.msra.mxu0 %v1529
    %2024 = vmatprep.subr.bf16.mxu0 %v1523
    %2025 = vmatpush2.bf16.msra.mxu0 %v1522
    %2026 = vmatprep.mubr.bf16.mxu0 %v464
    %2027 = vmatmul.mubr.bf16.gmra.mxu0 %v463
    %v2028 = vpop.f32.mrf.mxu0
    %v2029 = vadd.f32 %v736, %v2028
    %v2030 = vpop.f32.mrf.mxu0
    %v2031 = vadd.f32 %v740, %v2030
    %v2032 = vpop.f32.mrf.mxu0
    %v2033 = vpop.f32.mrf.mxu0
    %2034 = vdwg.mxu0
    %2035 = vmatprep.subr.bf16.mxu0 %v1628
    %2036 = vmatpush1.bf16.msra.mxu0 %v1627
    %2037 = vmatprep.subr.bf16.mxu0 %v1621
    %2038 = vmatpush1.bf16.msra.mxu0 %v1620
    %2039 = vmatprep.subr.bf16.mxu0 %v1614
    %2040 = vmatpush1.bf16.msra.mxu0 %v1613
    %2041 = vmatprep.subr.bf16.mxu0 %v1607
    %2042 = vmatpush1.bf16.msra.mxu0 %v1606
    %2043 = vmatprep.subr.bf16.mxu0 %v1600
    %2044 = vmatpush1.bf16.msra.mxu0 %v1599
    %2045 = vmatprep.subr.bf16.mxu0 %v1593
    %2046 = vmatpush1.bf16.msra.mxu0 %v1592
    %2047 = vmatprep.subr.bf16.mxu0 %v1586
    %2048 = vmatpush1.bf16.msra.mxu0 %v1585
    %2049 = vmatprep.subr.bf16.mxu0 %v1579
    %2050 = vmatpush1.bf16.msra.mxu0 %v1578
    %2051 = vmatprep.subr.bf16.mxu0 %v1684
    %2052 = vmatpush2.bf16.msra.mxu0 %v1683
    %2053 = vmatprep.subr.bf16.mxu0 %v1677
    %2054 = vmatpush2.bf16.msra.mxu0 %v1676
    %2055 = vmatprep.subr.bf16.mxu0 %v1670
    %2056 = vmatpush2.bf16.msra.mxu0 %v1669
    %2057 = vmatprep.subr.bf16.mxu0 %v1663
    %2058 = vmatpush2.bf16.msra.mxu0 %v1662
    %2059 = vmatprep.subr.bf16.mxu0 %v1656
    %2060 = vmatpush2.bf16.msra.mxu0 %v1655
    %2061 = vmatprep.subr.bf16.mxu0 %v1649
    %2062 = vmatpush2.bf16.msra.mxu0 %v1648
    %2063 = vmatprep.subr.bf16.mxu0 %v1642
    %2064 = vmatpush2.bf16.msra.mxu0 %v1641
    %2065 = vmatprep.subr.bf16.mxu0 %v1635
    %2066 = vmatpush2.bf16.msra.mxu0 %v1634
    %2067 = vmatprep.mubr.bf16.mxu0 %v466
    %2068 = vmatmul.mubr.bf16.gmra.mxu0 %v465
    %v2069 = vpop.f32.mrf.mxu0
    %v2070 = vadd.f32 %v2029, %v2069
    %v2071 = vpop.f32.mrf.mxu0
    %v2072 = vadd.f32 %v2031, %v2071
    %v2073 = vpop.f32.mrf.mxu0
    %v2074 = vpop.f32.mrf.mxu0
    %2075 = vdwg.mxu0
    %2076 = vmatprep.subr.bf16.mxu0 %v1518
    %2077 = vmatpush1.bf16.msra.mxu0 %v1517
    %2078 = vmatprep.subr.bf16.mxu0 %v1511
    %2079 = vmatpush1.bf16.msra.mxu0 %v1510
    %2080 = vmatprep.subr.bf16.mxu0 %v1504
    %2081 = vmatpush1.bf16.msra.mxu0 %v1503
    %2082 = vmatprep.subr.bf16.mxu0 %v1497
    %2083 = vmatpush1.bf16.msra.mxu0 %v1496
    %2084 = vmatprep.subr.bf16.mxu0 %v1490
    %2085 = vmatpush1.bf16.msra.mxu0 %v1489
    %2086 = vmatprep.subr.bf16.mxu0 %v1483
    %2087 = vmatpush1.bf16.msra.mxu0 %v1482
    %2088 = vmatprep.subr.bf16.mxu0 %v1476
    %2089 = vmatpush1.bf16.msra.mxu0 %v1475
    %2090 = vmatprep.subr.bf16.mxu0 %v1469
    %2091 = vmatpush1.bf16.msra.mxu0 %v1468
    %2092 = vmatprep.subr.bf16.mxu0 %v1574
    %2093 = vmatpush2.bf16.msra.mxu0 %v1573
    %2094 = vmatprep.subr.bf16.mxu0 %v1567
    %2095 = vmatpush2.bf16.msra.mxu0 %v1566
    %2096 = vmatprep.subr.bf16.mxu0 %v1560
    %2097 = vmatpush2.bf16.msra.mxu0 %v1559
    %2098 = vmatprep.subr.bf16.mxu0 %v1553
    %2099 = vmatpush2.bf16.msra.mxu0 %v1552
    %2100 = vmatprep.subr.bf16.mxu0 %v1546
    %2101 = vmatpush2.bf16.msra.mxu0 %v1545
    %2102 = vmatprep.subr.bf16.mxu0 %v1539
    %2103 = vmatpush2.bf16.msra.mxu0 %v1538
    %2104 = vmatprep.subr.bf16.mxu0 %v1532
    %2105 = vmatpush2.bf16.msra.mxu0 %v1531
    %2106 = vmatprep.subr.bf16.mxu0 %v1525
    %2107 = vmatpush2.bf16.msra.mxu0 %v1524
    %2108 = vmatprep.mubr.bf16.mxu0 %v464
    %2109 = vmatmul.mubr.bf16.gmra.mxu0 %v463
    %v2110 = vpop.f32.mrf.mxu0
    %v2111 = vadd.f32 %v744, %v2110
    %v2112 = vpop.f32.mrf.mxu0
    %v2113 = vadd.f32 %v748, %v2112
    %v2114 = vpop.f32.mrf.mxu0
    %v2115 = vpop.f32.mrf.mxu0
    %2116 = vdwg.mxu0
    %2117 = vmatprep.subr.bf16.mxu0 %v1630
    %2118 = vmatpush1.bf16.msra.mxu0 %v1629
    %2119 = vmatprep.subr.bf16.mxu0 %v1623
    %2120 = vmatpush1.bf16.msra.mxu0 %v1622
    %2121 = vmatprep.subr.bf16.mxu0 %v1616
    %2122 = vmatpush1.bf16.msra.mxu0 %v1615
    %2123 = vmatprep.subr.bf16.mxu0 %v1609
    %2124 = vmatpush1.bf16.msra.mxu0 %v1608
    %2125 = vmatprep.subr.bf16.mxu0 %v1602
    %2126 = vmatpush1.bf16.msra.mxu0 %v1601
    %2127 = vmatprep.subr.bf16.mxu0 %v1595
    %2128 = vmatpush1.bf16.msra.mxu0 %v1594
    %2129 = vmatprep.subr.bf16.mxu0 %v1588
    %2130 = vmatpush1.bf16.msra.mxu0 %v1587
    %2131 = vmatprep.subr.bf16.mxu0 %v1581
    %2132 = vmatpush1.bf16.msra.mxu0 %v1580
    %2133 = vmatprep.subr.bf16.mxu0 %v1686
    %2134 = vmatpush2.bf16.msra.mxu0 %v1685
    %2135 = vmatprep.subr.bf16.mxu0 %v1679
    %2136 = vmatpush2.bf16.msra.mxu0 %v1678
    %2137 = vmatprep.subr.bf16.mxu0 %v1672
    %2138 = vmatpush2.bf16.msra.mxu0 %v1671
    %2139 = vmatprep.subr.bf16.mxu0 %v1665
    %2140 = vmatpush2.bf16.msra.mxu0 %v1664
    %2141 = vmatprep.subr.bf16.mxu0 %v1658
    %2142 = vmatpush2.bf16.msra.mxu0 %v1657
    %2143 = vmatprep.subr.bf16.mxu0 %v1651
    %2144 = vmatpush2.bf16.msra.mxu0 %v1650
    %2145 = vmatprep.subr.bf16.mxu0 %v1644
    %2146 = vmatpush2.bf16.msra.mxu0 %v1643
    %2147 = vmatprep.subr.bf16.mxu0 %v1637
    %2148 = vmatpush2.bf16.msra.mxu0 %v1636
    %2149 = vmatprep.mubr.bf16.mxu0 %v466
    %2150 = vmatmul.mubr.bf16.gmra.mxu0 %v465
    %v2151 = vpop.f32.mrf.mxu0
    %v2152 = vadd.f32 %v2111, %v2151
    %v2153 = vpop.f32.mrf.mxu0
    %v2154 = vadd.f32 %v2113, %v2153
    %v2155 = vpop.f32.mrf.mxu0
    %v2156 = vpop.f32.mrf.mxu0
    %2157 = vdwg.mxu0
    %2158 = vmatprep.subr.bf16.mxu0 0
    %2159 = vmatpush1.bf16.msra.mxu0 %v1519
    %2160 = vmatprep.subr.bf16.mxu0 0
    %2161 = vmatpush1.bf16.msra.mxu0 %v1512
    %2162 = vmatprep.subr.bf16.mxu0 0
    %2163 = vmatpush1.bf16.msra.mxu0 %v1505
    %2164 = vmatprep.subr.bf16.mxu0 0
    %2165 = vmatpush1.bf16.msra.mxu0 %v1498
    %2166 = vmatprep.subr.bf16.mxu0 0
    %2167 = vmatpush1.bf16.msra.mxu0 %v1491
    %2168 = vmatprep.subr.bf16.mxu0 0
    %2169 = vmatpush1.bf16.msra.mxu0 %v1484
    %2170 = vmatprep.subr.bf16.mxu0 0
    %2171 = vmatpush1.bf16.msra.mxu0 %v1477
    %2172 = vmatprep.subr.bf16.mxu0 0
    %2173 = vmatpush1.bf16.msra.mxu0 %v1470
    %2174 = vmatprep.subr.bf16.mxu0 0
    %2175 = vmatpush2.bf16.msra.mxu0 %v1575
    %2176 = vmatprep.subr.bf16.mxu0 0
    %2177 = vmatpush2.bf16.msra.mxu0 %v1568
    %2178 = vmatprep.subr.bf16.mxu0 0
    %2179 = vmatpush2.bf16.msra.mxu0 %v1561
    %2180 = vmatprep.subr.bf16.mxu0 0
    %2181 = vmatpush2.bf16.msra.mxu0 %v1554
    %2182 = vmatprep.subr.bf16.mxu0 0
    %2183 = vmatpush2.bf16.msra.mxu0 %v1547
    %2184 = vmatprep.subr.bf16.mxu0 0
    %2185 = vmatpush2.bf16.msra.mxu0 %v1540
    %2186 = vmatprep.subr.bf16.mxu0 0
    %2187 = vmatpush2.bf16.msra.mxu0 %v1533
    %2188 = vmatprep.subr.bf16.mxu0 0
    %2189 = vmatpush2.bf16.msra.mxu0 %v1526
    %2190 = vmatprep.mubr.bf16.mxu0 %v464
    %2191 = vmatmul.mubr.bf16.gmra.mxu0 %v463
    %v2192 = vpop.f32.mrf.mxu0
    %v2193 = vadd.f32 %v752, %v2192
    %v2194 = vpop.f32.mrf.mxu0
    %v2195 = vpop.f32.mrf.mxu0
    %v2196 = vpop.f32.mrf.mxu0
    %2197 = vdwg.mxu0
    %2198 = vmatprep.subr.bf16.mxu0 0
    %2199 = vmatpush1.bf16.msra.mxu0 %v1631
    %2200 = vmatprep.subr.bf16.mxu0 0
    %2201 = vmatpush1.bf16.msra.mxu0 %v1624
    %2202 = vmatprep.subr.bf16.mxu0 0
    %2203 = vmatpush1.bf16.msra.mxu0 %v1617
    %2204 = vmatprep.subr.bf16.mxu0 0
    %2205 = vmatpush1.bf16.msra.mxu0 %v1610
    %2206 = vmatprep.subr.bf16.mxu0 0
    %2207 = vmatpush1.bf16.msra.mxu0 %v1603
    %2208 = vmatprep.subr.bf16.mxu0 0
    %2209 = vmatpush1.bf16.msra.mxu0 %v1596
    %2210 = vmatprep.subr.bf16.mxu0 0
    %2211 = vmatpush1.bf16.msra.mxu0 %v1589
    %2212 = vmatprep.subr.bf16.mxu0 0
    %2213 = vmatpush1.bf16.msra.mxu0 %v1582
    %2214 = vmatprep.subr.bf16.mxu0 0
    %2215 = vmatpush2.bf16.msra.mxu0 %v1687
    %2216 = vmatprep.subr.bf16.mxu0 0
    %2217 = vmatpush2.bf16.msra.mxu0 %v1680
    %2218 = vmatprep.subr.bf16.mxu0 0
    %2219 = vmatpush2.bf16.msra.mxu0 %v1673
    %2220 = vmatprep.subr.bf16.mxu0 0
    %2221 = vmatpush2.bf16.msra.mxu0 %v1666
    %2222 = vmatprep.subr.bf16.mxu0 0
    %2223 = vmatpush2.bf16.msra.mxu0 %v1659
    %2224 = vmatprep.subr.bf16.mxu0 0
    %2225 = vmatpush2.bf16.msra.mxu0 %v1652
    %2226 = vmatprep.subr.bf16.mxu0 0
    %2227 = vmatpush2.bf16.msra.mxu0 %v1645
    %2228 = vmatprep.subr.bf16.mxu0 0
    %2229 = vmatpush2.bf16.msra.mxu0 %v1638
    %2230 = vmatprep.mubr.bf16.mxu0 %v466
    %2231 = vmatmul.mubr.bf16.gmra.mxu0 %v465
    %v2232 = vpop.f32.mrf.mxu0
    %v2233 = vadd.f32 %v2193, %v2232
    %v2234 = vpop.f32.mrf.mxu0
    %v2235 = vpop.f32.mrf.mxu0
    %v2236 = vpop.f32.mrf.mxu0
    %2237 = vdwg.mxu0
    %2238 = vst [vmem:[#allocation11] sm:$0xff] %v1988
    %2239 = vst [vmem:[#allocation11 + $0x8] sm:$0xff] %v1990
    %2240 = vst [vmem:[#allocation11 + $0x10] sm:$0xff] %v2070
    %2241 = vst [vmem:[#allocation11 + $0x18] sm:$0xff] %v2072
    %2242 = vst [vmem:[#allocation11 + $0x20] sm:$0xff] %v2152
    %2243 = vst [vmem:[#allocation11 + $0x28] sm:$0xff] %v2154
    %2244 = vst [vmem:[#allocation11 + $0x30] sm:$0xff] %v2233
    // Predicated region
    $region50: #{tpu_custom_call.1} parent=1 // pred_check
      _
    $region51: #{tpu_custom_call.1} parent=1 // pred_check_branch
      %2246 = sbr.rel (0) target = $region53
    $region52: #{tpu_custom_call.1} parent=1 // pred_region
      %s2248 = ssub.s32 896, 896
      %2249 = vsyncadd [#allocation4], %s2248
      %s2251 = sshll.u32 [#allocation11], 4
      %s2252 = int_to_ptr.vmem [resolvable:$true] %s2251
      %2254 = dma.vmem_to_hbm [thread:$0]  %s2252, 896, %s7, [#allocation4]
    $region53: #{tpu_custom_call.1} parent=1 // pred_fallthru
      _
    // Predicated region
    $region54: #{tpu_custom_call.1} parent=1 // pred_check
      _
    $region55: #{tpu_custom_call.1} parent=1 // pred_check_branch
      %2256 = sbr.rel (0) target = $region57
    $region56: #{tpu_custom_call.1} parent=1 // pred_region
      %2257 = dma.done [#allocation4], 896
    $region57: #{tpu_custom_call.1} parent=1 // pred_fallthru
      _
    %2258 = vsyncpa [#allocation3], 1
    %2259 = vsyncpa [#allocation6], 1
    %2260 = vsyncpa [#allocation9], 1
    %2261 = vsyncpa [#allocation4], 1

</llo_original>
